<compile_context>
chip_gen: v7x
topology: tpu7x:2x2x1
jax: 0.10.0
libtpu: 0.0.40
codegen_flags: <defaults>
</compile_context>

<pallas_src>
import jax
import jax.numpy as jnp
from jax.experimental import pallas as pl
from jax.experimental.pallas import tpu as pltpu

# ----------------------------- configuration -------------------------------
STATE_DIM = 32
ACTION_DIM = 16
SRL_NET_ARCH = {"obs": [32, 32], "action": [32, 32]}      # OFENet dense-block widths
# TODO(synk): Critic default net_arch=[400,300]; scaled down to [64,32] to keep the
# fused two-critic heads inside a single 128-lane slab for this small-shape exercise.
QF_NET_ARCH = [64, 32]

OBS_LATENT = STATE_DIM + sum(SRL_NET_ARCH["obs"])                        # 96
ACT_OFF = OBS_LATENT                                                     # action lanes 96:112
LATENT_DIM = OBS_LATENT + ACTION_DIM + sum(SRL_NET_ARCH["action"])       # 176

LANES = 128           # every value / weight slab in the kernel is 128 lanes wide
NQ = 2                # q1 | q2

# packed-parameter row layout (all (128,128) slabs, 8-sublane aligned offsets)
ROW_W0 = 0            # OFENet phi1 block 0 : feature[0:128]  -> feature lanes 32:64
ROW_W1 = 128          # OFENet phi1 block 1 : feature[0:128]  -> feature lanes 64:96
ROW_W2A = 256         # OFENet phi2 block 0 : feature[0:128]  -> feature lanes 112:128
ROW_W2B = 384         # OFENet phi2 block 0 : feature[0:128]  -> feature lanes 128:144
ROW_W3A = 512         # OFENet phi2 block 1 : feature[0:128]  -> feature lanes 144:176
ROW_W3B = 640         # OFENet phi2 block 1 : feature[128:256]-> feature lanes 144:176
ROW_H1A = 768         # fused qf layer-1, low-half input
ROW_H1B = 896         # fused qf layer-1, high-half input
ROW_H2 = 1024         # fused qf layer-2 (block-diagonal)
ROW_H3 = 1152         # fused qf layer-3 (q1 -> lane 0, q2 -> lane 1)
ROW_BIAS = 1280       # 8 bias rows (see pack_params)
P_ROWS = 1288         # multiple of 8

BATCH_TILE = 128      # batch rows per grid step (mult. of 8, MXU-row friendly)


# ------------------------------ Pallas kernel ------------------------------
def critic_kernel(x_ref, p_ref, q_ref):
    # x_ref : (BT, 128) low half of the padded feature: obs 0:32, action 96:112, rest 0
    # p_ref : (P_ROWS, 128) packed weights/biases (zero outside real sub-blocks)
    # q_ref : (BT, 128) q1 in lane 0, q2 in lane 1, rest junk/zero
    def mm(v, row):
        return jnp.dot(v, p_ref[row:row + LANES, :],
                       preferred_element_type=jnp.float32)

    def bias(i):
        return p_ref[ROW_BIAS + i:ROW_BIAS + i + 1, :]

    hlo = x_ref[...]                                       # feature lanes 0:128

    # OFENet phi1 blocks: "concat" realized as add into disjoint, pre-zeroed lane slots.
    hlo = hlo + jnp.maximum(mm(hlo, ROW_W0) + bias(0), 0.0)   # -> lanes 32:64
    hlo = hlo + jnp.maximum(mm(hlo, ROW_W1) + bias(1), 0.0)   # -> lanes 64:96

    # OFENet phi2 block 0: fan_in 112, output at feature lanes 112:144 (straddles the
    # 128-lane boundary -> split into a low-half and a high-half contribution).
    y2a = jnp.maximum(mm(hlo, ROW_W2A) + bias(2), 0.0)        # -> lanes 112:128
    hhi = jnp.maximum(mm(hlo, ROW_W2B) + bias(3), 0.0)        # -> lanes 128:144
    hlo = hlo + y2a

    # OFENet phi2 block 1: fan_in 144 = low half + hhi lanes 0:16, output lanes 144:176.
    hhi = hhi + jnp.maximum(mm(hlo, ROW_W3A) + mm(hhi, ROW_W3B) + bias(4), 0.0)

    # fused qf1/qf2 heads (lane-dense 128-wide GEMMs)
    z = jnp.maximum(mm(hlo, ROW_H1A) + mm(hhi, ROW_H1B) + bias(5), 0.0)
    z = jnp.maximum(mm(z, ROW_H2) + bias(6), 0.0)
    q = mm(z, ROW_H3) + bias(7)                               # q1 lane 0, q2 lane 1

    q_ref[...] = q.astype(q_ref.dtype)


def critic_forward(obs, actions, packed, *, batch_tile=BATCH_TILE):
    """obs: (B, state_dim), actions: (B, action_dim), packed: (P_ROWS, 128).
    Returns (q1, q2), each (B, 1)."""
    B = obs.shape[0]
    n_tiles = pl.cdiv(B, batch_tile)
    Bp = n_tiles * batch_tile

    # Layout plumbing (host side): place obs/action into their lane slots of the low
    # half of the padded feature vector; remaining lanes stay zero for the in-kernel
    # add-"concat".  The high half starts all-zero and is synthesized in-kernel.
    x = jnp.zeros((Bp, LANES), jnp.float32)
    x = x.at[:B, 0:STATE_DIM].set(obs.astype(jnp.float32))
    x = x.at[:B, ACT_OFF:ACT_OFF + ACTION_DIM].set(actions.astype(jnp.float32))

    q = pl.pallas_call(
        critic_kernel,
        out_shape=jax.ShapeDtypeStruct((Bp, LANES), jnp.float32),
        grid_spec=pltpu.PrefetchScalarGridSpec(
            num_scalar_prefetch=0,
            grid=(n_tiles,),
            in_specs=[
                pl.BlockSpec((batch_tile, LANES), lambda i: (i, 0)),
                # constant block index -> weights DMA'd once, resident across the grid
                pl.BlockSpec((P_ROWS, LANES), lambda i: (0, 0)),
            ],
            out_specs=pl.BlockSpec((batch_tile, LANES), lambda i: (i, 0)),
        ),
        compiler_params=pltpu.CompilerParams(
            dimension_semantics=("parallel",)),   # shards batch tiles across v7x cores
    )(x, packed)

    return q[:B, 0:1], q[:B, 1:2]


# ------------------------- parameter construction --------------------------
def _init_linear(key, fan_in, fan_out):
    """PyTorch nn.Linear default init, weight stored as (in, out)."""
    kw, kb = jax.random.split(key)
    bound = 1.0 / jnp.sqrt(jnp.float32(fan_in))
    w = jax.random.uniform(kw, (fan_in, fan_out), jnp.float32, -bound, bound)
    b = jax.random.uniform(kb, (1, fan_out), jnp.float32, -bound, bound)
    return w, b


def make_params(key):
    layer_dims = []
    d = STATE_DIM
    for u in SRL_NET_ARCH["obs"]:
        layer_dims.append((d, u)); d += u
    d += ACTION_DIM
    for u in SRL_NET_ARCH["action"]:
        layer_dims.append((d, u)); d += u
    assert d == LATENT_DIM
    for _ in range(2):                      # qf1, qf2
        din = LATENT_DIM
        for u in QF_NET_ARCH:
            layer_dims.append((din, u)); din = u
        layer_dims.append((din, 1))
    keys = jax.random.split(key, len(layer_dims))
    return [_init_linear(k, fi, fo) for k, (fi, fo) in zip(keys, layer_dims)]


def pack_params(params):
    """Pack all 10 Linear layers into one lane-aligned (P_ROWS, 128) f32 blob."""
    # TODO(synk): the blob could be stored as bf16 (f32 accumulate in-kernel) on
    # v6e/v7x once this workload is compute-visible; kept f32 for exact parity.
    p = jnp.zeros((P_ROWS, LANES), jnp.float32)

    (w0, b0), (w1, b1), (w2, b2), (w3, b3) = params[0:4]
    (w11, b11), (w12, b12), (w13, b13) = params[4:7]
    (w21, b21), (w22, b22), (w23, b23) = params[7:10]

    # phi1 block 0: 32 -> 32, output at feature lanes 32:64
    p = p.at[ROW_W0:ROW_W0 + 32, 32:64].set(w0)
    p = p.at[ROW_BIAS + 0, 32:64].set(b0[0])
    # phi1 block 1: 64 -> 32, output at feature lanes 64:96
    p = p.at[ROW_W1:ROW_W1 + 64, 64:96].set(w1)
    p = p.at[ROW_BIAS + 1, 64:96].set(b1[0])
    # phi2 block 0: 112 -> 32, output at feature lanes 112:144 (split at lane 128)
    p = p.at[ROW_W2A:ROW_W2A + 112, 112:128].set(w2[:, 0:16])
    p = p.at[ROW_W2B:ROW_W2B + 112, 0:16].set(w2[:, 16:32])
    p = p.at[ROW_BIAS + 2, 112:128].set(b2[0, 0:16])
    p = p.at[ROW_BIAS + 3, 0:16].set(b2[0, 16:32])
    # phi2 block 1: 144 -> 32, output at feature lanes 144:176 (hhi lanes 16:48)
    p = p.at[ROW_W3A:ROW_W3A + 128, 16:48].set(w3[0:128, :])
    p = p.at[ROW_W3B:ROW_W3B + 16, 16:48].set(w3[128:144, :])
    p = p.at[ROW_BIAS + 4, 16:48].set(b3[0])

    # fused head layer 1: (176 -> 64 | 64), input split into low/high halves
    p = p.at[ROW_H1A:ROW_H1A + 128, 0:64].set(w11[0:128, :])
    p = p.at[ROW_H1B:ROW_H1B + 48, 0:64].set(w11[128:176, :])
    p = p.at[ROW_H1A:ROW_H1A + 128, 64:128].set(w21[0:128, :])
    p = p.at[ROW_H1B:ROW_H1B + 48, 64:128].set(w21[128:176, :])
    p = p.at[ROW_BIAS + 5, 0:64].set(b11[0])
    p = p.at[ROW_BIAS + 5, 64:128].set(b21[0])

    # fused head layer 2: block-diagonal (64|64 -> 32|32), lane-padded to 128
    p = p.at[ROW_H2 + 0:ROW_H2 + 64, 0:32].set(w12)
    p = p.at[ROW_H2 + 64:ROW_H2 + 128, 64:96].set(w22)
    p = p.at[ROW_BIAS + 6, 0:32].set(b12[0])
    p = p.at[ROW_BIAS + 6, 64:96].set(b22[0])

    # fused head layer 3: q1 -> lane 0, q2 -> lane 1
    p = p.at[ROW_H3 + 0:ROW_H3 + 32, 0:1].set(w13)
    p = p.at[ROW_H3 + 64:ROW_H3 + 96, 1:2].set(w23)
    p = p.at[ROW_BIAS + 7, 0].set(b13[0, 0])
    p = p.at[ROW_BIAS + 7, 1].set(b23[0, 0])
    return p


# ------------------------------ pure-JAX ref --------------------------------
def critic_ref(obs, actions, params):
    def lin(x, wb, relu=True):
        w, b = wb
        y = x @ w + b
        return jnp.maximum(y, 0.0) if relu else y

    wo1, wo2, wa1, wa2 = params[0], params[1], params[2], params[3]
    qf1, qf2 = params[4:7], params[7:10]

    h = obs
    h = jnp.concatenate([h, lin(h, wo1)], axis=-1)
    h = jnp.concatenate([h, lin(h, wo2)], axis=-1)
    g = jnp.concatenate([h, actions], axis=-1)
    g = jnp.concatenate([g, lin(g, wa1)], axis=-1)
    g = jnp.concatenate([g, lin(g, wa2)], axis=-1)

    def head(x, layers):
        x = lin(x, layers[0]); x = lin(x, layers[1])
        return lin(x, layers[2], relu=False)

    return head(g, qf1), head(g, qf2)


# ---------------------------------- main ------------------------------------
if __name__ == "__main__":
    key = jax.random.PRNGKey(0)
    k_obs, k_act, k_par = jax.random.split(key, 3)

    BATCH = 200   # not a tile multiple on purpose: exercises batch padding (-> 2 tiles)
    obs = jax.random.normal(k_obs, (BATCH, STATE_DIM), jnp.float32)
    actions = jax.random.normal(k_act, (BATCH, ACTION_DIM), jnp.float32)

    params = make_params(k_par)
    packed = pack_params(params)

    q1, q2 = critic_forward(obs, actions, packed)
    jax.block_until_ready((q1, q2))

    r1, r2 = critic_ref(obs, actions, params)
    assert q1.shape == (BATCH, 1) and q2.shape == (BATCH, 1)
    assert jnp.allclose(q1, r1, atol=2e-4, rtol=2e-4)
    assert jnp.allclose(q2, r2, atol=2e-4, rtol=2e-4)

    # TODO(synk): feature_extractor1 is aliase-selected in the original code; assumed to
    # be the identity/flatten extractor (features_dim1 == state_dim).
    print("KERNEL_OK")
</pallas_src>

<mosaic_0001>
module attributes {stable_mosaic.version = 11 : i64} {
  func.func @critic_kernel(%arg0: i32, %arg1: memref<128x128xf32, #tpu.memory_space<vmem>>, %arg2: memref<1288x128xf32, #tpu.memory_space<vmem>>, %arg3: memref<128x128xf32, #tpu.memory_space<vmem>>) attributes {dimension_semantics = [#tpu.dimension_semantics<parallel>], iteration_bounds = array<i64: 2>, scalar_prefetch = 0 : i64, scratch_operands = 0 : i64, tpu.core_type = #tpu.core_type<tc>, window_params = [{transform_indices = @transform_0, window_bounds = array<i64: 128, 128>}, {pipeline_mode = #tpu.pipeline_mode<synchronous>, transform_indices = @transform_1, window_bounds = array<i64: 1288, 128>}, {transform_indices = @transform_2, window_bounds = array<i64: 128, 128>}]} {
    %c0 = arith.constant 0 : index
    %c0_0 = arith.constant 0 : index
    %0 = vector.load %arg1[%c0, %c0_0] : memref<128x128xf32, #tpu.memory_space<vmem>>, vector<128x128xf32>
    %c0_1 = arith.constant 0 : index
    %c0_2 = arith.constant 0 : index
    %1 = vector.load %arg2[%c0_1, %c0_2] : memref<1288x128xf32, #tpu.memory_space<vmem>>, vector<128x128xf32>
    %cst = arith.constant dense<0.000000e+00> : vector<128x128xf32>
    %2 = tpu.matmul %0, %1, %cst {dimension_numbers = #tpu.dot_dimension_numbers<[1], [0], [0], [1], [0, 0, 1, 1], [], []>} : vector<128x128xf32>, vector<128x128xf32>, vector<128x128xf32> -> vector<128x128xf32>
    %c1280 = arith.constant 1280 : index
    %c0_3 = arith.constant 0 : index
    %3 = vector.load %arg2[%c1280, %c0_3] : memref<1288x128xf32, #tpu.memory_space<vmem>>, vector<1x128xf32>
    %4 = vector.broadcast %3 : vector<1x128xf32> to vector<128x128xf32>
    %5 = arith.addf %2, %4 : vector<128x128xf32>
    %cst_4 = arith.constant 0.000000e+00 : f32
    %6 = vector.broadcast %cst_4 : f32 to vector<128x128xf32>
    %7 = arith.maximumf %5, %6 : vector<128x128xf32>
    %8 = arith.addf %0, %7 : vector<128x128xf32>
    %c128 = arith.constant 128 : index
    %c0_5 = arith.constant 0 : index
    %9 = vector.load %arg2[%c128, %c0_5] : memref<1288x128xf32, #tpu.memory_space<vmem>>, vector<128x128xf32>
    %cst_6 = arith.constant dense<0.000000e+00> : vector<128x128xf32>
    %10 = tpu.matmul %8, %9, %cst_6 {dimension_numbers = #tpu.dot_dimension_numbers<[1], [0], [0], [1], [0, 0, 1, 1], [], []>} : vector<128x128xf32>, vector<128x128xf32>, vector<128x128xf32> -> vector<128x128xf32>
    %c1281 = arith.constant 1281 : index
    %c0_7 = arith.constant 0 : index
    %11 = vector.load %arg2[%c1281, %c0_7] : memref<1288x128xf32, #tpu.memory_space<vmem>>, vector<1x128xf32>
    %12 = vector.broadcast %11 : vector<1x128xf32> to vector<128x128xf32>
    %13 = arith.addf %10, %12 : vector<128x128xf32>
    %cst_8 = arith.constant 0.000000e+00 : f32
    %14 = vector.broadcast %cst_8 : f32 to vector<128x128xf32>
    %15 = arith.maximumf %13, %14 : vector<128x128xf32>
    %16 = arith.addf %8, %15 : vector<128x128xf32>
    %c256 = arith.constant 256 : index
    %c0_9 = arith.constant 0 : index
    %17 = vector.load %arg2[%c256, %c0_9] : memref<1288x128xf32, #tpu.memory_space<vmem>>, vector<128x128xf32>
    %cst_10 = arith.constant dense<0.000000e+00> : vector<128x128xf32>
    %18 = tpu.matmul %16, %17, %cst_10 {dimension_numbers = #tpu.dot_dimension_numbers<[1], [0], [0], [1], [0, 0, 1, 1], [], []>} : vector<128x128xf32>, vector<128x128xf32>, vector<128x128xf32> -> vector<128x128xf32>
    %c1282 = arith.constant 1282 : index
    %c0_11 = arith.constant 0 : index
    %19 = vector.load %arg2[%c1282, %c0_11] : memref<1288x128xf32, #tpu.memory_space<vmem>>, vector<1x128xf32>
    %20 = vector.broadcast %19 : vector<1x128xf32> to vector<128x128xf32>
    %21 = arith.addf %18, %20 : vector<128x128xf32>
    %cst_12 = arith.constant 0.000000e+00 : f32
    %22 = vector.broadcast %cst_12 : f32 to vector<128x128xf32>
    %23 = arith.maximumf %21, %22 : vector<128x128xf32>
    %c384 = arith.constant 384 : index
    %c0_13 = arith.constant 0 : index
    %24 = vector.load %arg2[%c384, %c0_13] : memref<1288x128xf32, #tpu.memory_space<vmem>>, vector<128x128xf32>
    %cst_14 = arith.constant dense<0.000000e+00> : vector<128x128xf32>
    %25 = tpu.matmul %16, %24, %cst_14 {dimension_numbers = #tpu.dot_dimension_numbers<[1], [0], [0], [1], [0, 0, 1, 1], [], []>} : vector<128x128xf32>, vector<128x128xf32>, vector<128x128xf32> -> vector<128x128xf32>
    %c1283 = arith.constant 1283 : index
    %c0_15 = arith.constant 0 : index
    %26 = vector.load %arg2[%c1283, %c0_15] : memref<1288x128xf32, #tpu.memory_space<vmem>>, vector<1x128xf32>
    %27 = vector.broadcast %26 : vector<1x128xf32> to vector<128x128xf32>
    %28 = arith.addf %25, %27 : vector<128x128xf32>
    %cst_16 = arith.constant 0.000000e+00 : f32
    %29 = vector.broadcast %cst_16 : f32 to vector<128x128xf32>
    %30 = arith.maximumf %28, %29 : vector<128x128xf32>
    %31 = arith.addf %16, %23 : vector<128x128xf32>
    %c512 = arith.constant 512 : index
    %c0_17 = arith.constant 0 : index
    %32 = vector.load %arg2[%c512, %c0_17] : memref<1288x128xf32, #tpu.memory_space<vmem>>, vector<128x128xf32>
    %cst_18 = arith.constant dense<0.000000e+00> : vector<128x128xf32>
    %33 = tpu.matmul %31, %32, %cst_18 {dimension_numbers = #tpu.dot_dimension_numbers<[1], [0], [0], [1], [0, 0, 1, 1], [], []>} : vector<128x128xf32>, vector<128x128xf32>, vector<128x128xf32> -> vector<128x128xf32>
    %c640 = arith.constant 640 : index
    %c0_19 = arith.constant 0 : index
    %34 = vector.load %arg2[%c640, %c0_19] : memref<1288x128xf32, #tpu.memory_space<vmem>>, vector<128x128xf32>
    %cst_20 = arith.constant dense<0.000000e+00> : vector<128x128xf32>
    %35 = tpu.matmul %30, %34, %cst_20 {dimension_numbers = #tpu.dot_dimension_numbers<[1], [0], [0], [1], [0, 0, 1, 1], [], []>} : vector<128x128xf32>, vector<128x128xf32>, vector<128x128xf32> -> vector<128x128xf32>
    %36 = arith.addf %33, %35 : vector<128x128xf32>
    %c1284 = arith.constant 1284 : index
    %c0_21 = arith.constant 0 : index
    %37 = vector.load %arg2[%c1284, %c0_21] : memref<1288x128xf32, #tpu.memory_space<vmem>>, vector<1x128xf32>
    %38 = vector.broadcast %37 : vector<1x128xf32> to vector<128x128xf32>
    %39 = arith.addf %36, %38 : vector<128x128xf32>
    %cst_22 = arith.constant 0.000000e+00 : f32
    %40 = vector.broadcast %cst_22 : f32 to vector<128x128xf32>
    %41 = arith.maximumf %39, %40 : vector<128x128xf32>
    %42 = arith.addf %30, %41 : vector<128x128xf32>
    %c768 = arith.constant 768 : index
    %c0_23 = arith.constant 0 : index
    %43 = vector.load %arg2[%c768, %c0_23] : memref<1288x128xf32, #tpu.memory_space<vmem>>, vector<128x128xf32>
    %cst_24 = arith.constant dense<0.000000e+00> : vector<128x128xf32>
    %44 = tpu.matmul %31, %43, %cst_24 {dimension_numbers = #tpu.dot_dimension_numbers<[1], [0], [0], [1], [0, 0, 1, 1], [], []>} : vector<128x128xf32>, vector<128x128xf32>, vector<128x128xf32> -> vector<128x128xf32>
    %c896 = arith.constant 896 : index
    %c0_25 = arith.constant 0 : index
    %45 = vector.load %arg2[%c896, %c0_25] : memref<1288x128xf32, #tpu.memory_space<vmem>>, vector<128x128xf32>
    %cst_26 = arith.constant dense<0.000000e+00> : vector<128x128xf32>
    %46 = tpu.matmul %42, %45, %cst_26 {dimension_numbers = #tpu.dot_dimension_numbers<[1], [0], [0], [1], [0, 0, 1, 1], [], []>} : vector<128x128xf32>, vector<128x128xf32>, vector<128x128xf32> -> vector<128x128xf32>
    %47 = arith.addf %44, %46 : vector<128x128xf32>
    %c1285 = arith.constant 1285 : index
    %c0_27 = arith.constant 0 : index
    %48 = vector.load %arg2[%c1285, %c0_27] : memref<1288x128xf32, #tpu.memory_space<vmem>>, vector<1x128xf32>
    %49 = vector.broadcast %48 : vector<1x128xf32> to vector<128x128xf32>
    %50 = arith.addf %47, %49 : vector<128x128xf32>
    %cst_28 = arith.constant 0.000000e+00 : f32
    %51 = vector.broadcast %cst_28 : f32 to vector<128x128xf32>
    %52 = arith.maximumf %50, %51 : vector<128x128xf32>
    %c1024 = arith.constant 1024 : index
    %c0_29 = arith.constant 0 : index
    %53 = vector.load %arg2[%c1024, %c0_29] : memref<1288x128xf32, #tpu.memory_space<vmem>>, vector<128x128xf32>
    %cst_30 = arith.constant dense<0.000000e+00> : vector<128x128xf32>
    %54 = tpu.matmul %52, %53, %cst_30 {dimension_numbers = #tpu.dot_dimension_numbers<[1], [0], [0], [1], [0, 0, 1, 1], [], []>} : vector<128x128xf32>, vector<128x128xf32>, vector<128x128xf32> -> vector<128x128xf32>
    %c1286 = arith.constant 1286 : index
    %c0_31 = arith.constant 0 : index
    %55 = vector.load %arg2[%c1286, %c0_31] : memref<1288x128xf32, #tpu.memory_space<vmem>>, vector<1x128xf32>
    %56 = vector.broadcast %55 : vector<1x128xf32> to vector<128x128xf32>
    %57 = arith.addf %54, %56 : vector<128x128xf32>
    %cst_32 = arith.constant 0.000000e+00 : f32
    %58 = vector.broadcast %cst_32 : f32 to vector<128x128xf32>
    %59 = arith.maximumf %57, %58 : vector<128x128xf32>
    %c1152 = arith.constant 1152 : index
    %c0_33 = arith.constant 0 : index
    %60 = vector.load %arg2[%c1152, %c0_33] : memref<1288x128xf32, #tpu.memory_space<vmem>>, vector<128x128xf32>
    %cst_34 = arith.constant dense<0.000000e+00> : vector<128x128xf32>
    %61 = tpu.matmul %59, %60, %cst_34 {dimension_numbers = #tpu.dot_dimension_numbers<[1], [0], [0], [1], [0, 0, 1, 1], [], []>} : vector<128x128xf32>, vector<128x128xf32>, vector<128x128xf32> -> vector<128x128xf32>
    %c1287 = arith.constant 1287 : index
    %c0_35 = arith.constant 0 : index
    %62 = vector.load %arg2[%c1287, %c0_35] : memref<1288x128xf32, #tpu.memory_space<vmem>>, vector<1x128xf32>
    %63 = vector.broadcast %62 : vector<1x128xf32> to vector<128x128xf32>
    %64 = arith.addf %61, %63 : vector<128x128xf32>
    %c0_36 = arith.constant 0 : index
    %c0_37 = arith.constant 0 : index
    %65 = vector.load %arg3[%c0_36, %c0_37] : memref<128x128xf32, #tpu.memory_space<vmem>>, vector<128x128xf32>
    tpu.vector_store %arg3[%c0_36, %c0_37], %64 {strides = array<i32>} : memref<128x128xf32, #tpu.memory_space<vmem>>, vector<128x128xf32>,
    return
  }
  func.func @transform_0(%arg0: i32) -> (i32, i32) {
    %c0_i32 = arith.constant 0 : i32
    %c0_i32_0 = arith.constant 0 : i32
    return %arg0, %c0_i32 : i32, i32
  }
  func.func @transform_1(%arg0: i32) -> (i32, i32) {
    %c0_i32 = arith.constant 0 : i32
    %c0_i32_0 = arith.constant 0 : i32
    %c0_i32_1 = arith.constant 0 : i32
    return %c0_i32, %c0_i32_0 : i32, i32
  }
  func.func @transform_2(%arg0: i32) -> (i32, i32) {
    %c0_i32 = arith.constant 0 : i32
    %c0_i32_0 = arith.constant 0 : i32
    return %arg0, %c0_i32 : i32, i32
  }
}

</mosaic_0001>

<llo_original>
// kernel: tpu_custom_call.1
$region0: #{tpu_custom_call.1}
  #allocation0 [shape = 'u32[]', space=smem, size = 0x4, offset = 0x4, fixed_abs, tag = 'smem constant byte address 0x4 - core index']
  #allocation1 [shape = 'u32[144,128]{1,0:T(1,128)}', space=vmem, size = 0x12000, scoped, tag = 'internal scratch']
  %s0 = inlined_call_operand.hbm [shape: f32[256,128], index: 0, kind: input, shape index: {}]
  %s1 = inlined_call_operand.hbm [shape: f32[1288,128], index: 1, kind: input, shape index: {}]
  %s2 = inlined_call_operand.hbm [shape: f32[256,128], index: 2, kind: output, shape index: {}]
  %s3 = sld [smem:[#allocation0]]
  $region49: #{tpu_custom_call.1} parent=0
    _
  %s5 = ssub.s32 1, %s3
  %s6 = scalar_select 0, %s5, %s3
  $region1: #{tpu_custom_call.1} parent=0
    #allocation2 [shape = 'u8[131072]{0}', space=vmem, size = 0x20000, scoped, tag = 'input window, operand 0']
    #allocation3 [shape = 's32[2]{0}', space=sflag, size = 0x8, scoped, tag = 'scoped memory for tpu_custom_call.1']
    #allocation4 [shape = 's32[2]{0}', space=sflag, size = 0x8, scoped, tag = 'scoped memory for tpu_custom_call.1']
    #allocation5 [shape = 'u8[659456]{0}', space=vmem, size = 0xa1000, scoped, tag = 'input window, operand 1, single buffered']
    #allocation6 [shape = 's32[1]{0}', space=sflag, size = 0x4, scoped, tag = 'scoped memory for tpu_custom_call.1']
    #allocation7 [shape = 'u8[131072]{0}', space=vmem, size = 0x20000, scoped, tag = 'output window, operand 0']
    %7 = vsyncpa [#allocation3], 0
    %s8 = scalar_lea.sflag [#allocation3], 1
    %9 = vsyncpa %s8, 0
    %10 = vsyncpa [#allocation6], 0
    %11 = vsyncpa [#allocation4], 0
    %s12 = scalar_lea.sflag [#allocation4], 1
    %13 = vsyncpa %s12, 0
    loop: start=0, step=1, limit=4
    $region2: #{tpu_custom_call.1} parent=1 // loop_pre_header
      _
    $region3: #{tpu_custom_call.1} parent=1 // loop_header
      %s15 = sphi 0, %s19
      %p16 = scmp.ge.s32.totalorder %s15, 4
      %s25 = sphi 0, %s27
      %s28 = sphi 0, %s25
      %s29 = sphi 0, %s28
      %s45 = sphi 0, %s29
      %s49 = sphi 0, %s49
      %s51 = sphi 0, %s49
      %s52 = sphi 0, %s51
      %s66 = sphi 0, %s52
      %s72 = sphi 0, %s74
      %s75 = sphi 0, %s72
      %s76 = sphi 0, %s75
      %s92 = sphi 0, %s76
    $region4: #{tpu_custom_call.1} parent=1 // loop_header_branch
      %18 = sbr.rel (%p16) target = $region8
    $region5: #{tpu_custom_call.1} parent=1 // loop_body
      %s20 = ssub.s32 %s15, 1
      %s21 = ssub.s32 %s15, 2
      %s22 = sadd.s32 %s15, 1
      %s23 = ssub.s32 %s15, %s22
      %p24 = scmp.eq.s32.totalorder %s23, 0
      %s26 = sadd.s32 %s25, 1
      %s27 = scalar_select %p24, %s25, %s26
      %p30 = pneg %p24
      %p31 = scmp.eq.s32.totalorder %s15, 1
      %p32 = por %p30, %p31
      %p33 = scmp.ne.s32.totalorder %s25, %s28
      %p34 = scmp.eq.s32.totalorder %s15, 0
      %p35 = por %p33, %p34
      %p36 = scmp.ne.s32.totalorder %s25, %s28
      %p37 = scmp.eq.s32.totalorder %s20, 1
      %p38 = por %p36, %p37
      %p39 = scmp.ne.s32.totalorder %s28, %s29
      %p40 = scmp.eq.s32.totalorder %s20, 0
      %p41 = por %p39, %p40
      %p42 = scmp.ne.s32.totalorder %s28, %s29
      %p43 = scmp.eq.s32.totalorder %s21, 1
      %p44 = por %p42, %p43
      %p46 = scmp.ne.s32.totalorder %s29, %s45
      %p47 = scmp.eq.s32.totalorder %s21, 0
      %p48 = por %p46, %p47
      %s50 = sadd.s32 %s49, 1
      %p53 = scmp.eq.s32.totalorder %s15, 1
      %p54 = scmp.ne.s32.totalorder %s49, %s51
      %p55 = scmp.eq.s32.totalorder %s15, 0
      %p56 = por %p54, %p55
      %p57 = scmp.ne.s32.totalorder %s49, %s51
      %p58 = scmp.eq.s32.totalorder %s20, 1
      %p59 = por %p57, %p58
      %p60 = scmp.ne.s32.totalorder %s51, %s52
      %p61 = scmp.eq.s32.totalorder %s20, 0
      %p62 = por %p60, %p61
      %p63 = scmp.ne.s32.totalorder %s51, %s52
      %p64 = scmp.eq.s32.totalorder %s21, 1
      %p65 = por %p63, %p64
      %p67 = scmp.ne.s32.totalorder %s52, %s66
      %p68 = scmp.eq.s32.totalorder %s21, 0
      %p69 = por %p67, %p68
      %s70 = ssub.s32 %s15, %s22
      %p71 = scmp.eq.s32.totalorder %s70, 0
      %s73 = sadd.s32 %s72, 1
      %s74 = scalar_select %p71, %s72, %s73
      %p77 = pneg %p71
      %p78 = scmp.eq.s32.totalorder %s15, 1
      %p79 = por %p77, %p78
      %p80 = scmp.ne.s32.totalorder %s72, %s75
      %p81 = scmp.eq.s32.totalorder %s15, 0
      %p82 = por %p80, %p81
      %p83 = scmp.ne.s32.totalorder %s72, %s75
      %p84 = scmp.eq.s32.totalorder %s20, 1
      %p85 = por %p83, %p84
      %p86 = scmp.ne.s32.totalorder %s75, %s76
      %p87 = scmp.eq.s32.totalorder %s20, 0
      %p88 = por %p86, %p87
      %p89 = scmp.ne.s32.totalorder %s75, %s76
      %p90 = scmp.eq.s32.totalorder %s21, 1
      %p91 = por %p89, %p90
      %p93 = scmp.ne.s32.totalorder %s76, %s92
      %p94 = scmp.eq.s32.totalorder %s21, 0
      %p95 = por %p93, %p94
      %p96 = scmp.le.s32.totalorder 1, %s15
      %p97 = scmp.lt.s32.totalorder %s15, 3
      %p98 = pnand %p96, %p97
      %p99 = pneg %p98
      // Predicated region
      $region9: #{tpu_custom_call.1} parent=5 // pred_check
        _
      $region10: #{tpu_custom_call.1} parent=5 // pred_check_branch
        %101 = sbr.rel (%p98) target = $region12
      $region11: #{tpu_custom_call.1} parent=5 // pred_region
        %s102 = ssub.s32 %s15, 1
        // Predicated region
        $region13: #{tpu_custom_call.1} parent=11 // pred_check
          %p103 = pneg %p62
        $region14: #{tpu_custom_call.1} parent=11 // pred_check_branch
          %105 = sbr.rel (%p103) target = $region16
        $region15: #{tpu_custom_call.1} parent=11 // pred_region
          %s107 = ssub.s32 20608, 20608
          %108 = vsyncadd [#allocation6], %s107
          %s109 = sshll.u32 [#allocation5], 4
          %s110 = int_to_ptr.vmem [resolvable:$true] %s109
          %115 = dma.hbm_to_vmem [thread:$0]  %s1, 20608, %s110, [#allocation6], 128, 128, 8
        $region16: #{tpu_custom_call.1} parent=11 // pred_fallthru
          _
      $region12: #{tpu_custom_call.1} parent=5 // pred_fallthru
        _
      %p116 = scmp.lt.s32.totalorder %s15, 2
      // Predicated region
      $region17: #{tpu_custom_call.1} parent=5 // pred_check
        %p117 = pneg %p116
      $region18: #{tpu_custom_call.1} parent=5 // pred_check_branch
        %119 = sbr.rel (%p117) target = $region20
      $region19: #{tpu_custom_call.1} parent=5 // pred_region
        // Predicated region
        $region21: #{tpu_custom_call.1} parent=19 // pred_check
          %p120 = pneg %p35
        $region22: #{tpu_custom_call.1} parent=19 // pred_check_branch
          %122 = sbr.rel (%p120) target = $region24
        $region23: #{tpu_custom_call.1} parent=19 // pred_region
          %s123 = sand.u32 %s25, 1
          %s124 = scalar_lea.sflag [#allocation3], %s123
          %s125 = sand.u32 %s25, 1
          %s126 = smul.addr %s125, 128
          %s127 = scalar_lea.vmem [#allocation2], %s126
          %s128 = smul.u32 16, %s15
          %s130 = ssub.s32 2048, 2048
          %131 = vsyncadd %s124, %s130
          %s132 = smul.addr %s128, 128
          %s133 = scalar_lea.hbm %s0, %s132
          %s134 = sshll.u32 %s127, 4
          %s135 = int_to_ptr.vmem [resolvable:$true] %s134
          %140 = dma.hbm_to_vmem [thread:$0]  %s133, 2048, %s135, %s124, 128, 128, 8
        $region24: #{tpu_custom_call.1} parent=19 // pred_fallthru
          _
      $region20: #{tpu_custom_call.1} parent=5 // pred_fallthru
        _
      %p141 = scmp.le.s32.totalorder 1, %s15
      %p142 = scmp.lt.s32.totalorder %s15, 3
      %p143 = pnand %p141, %p142
      %p144 = pneg %p143
      // Predicated region
      $region25: #{tpu_custom_call.1} parent=5 // pred_check
        _
      $region26: #{tpu_custom_call.1} parent=5 // pred_check_branch
        %146 = sbr.rel (%p143) target = $region28
      $region27: #{tpu_custom_call.1} parent=5 // pred_region
        %s147 = ssub.s32 %s15, 1
        %s148 = sand.u32 %s28, 1
        %s149 = scalar_lea.sflag [#allocation3], %s148
        %s150 = sand.u32 %s28, 1
        %s151 = smul.addr %s150, 128
        %s152 = scalar_lea.vmem [#allocation2], %s151
        // Predicated region
        $region29: #{tpu_custom_call.1} parent=27 // pred_check
          %p153 = pneg %p41
        $region30: #{tpu_custom_call.1} parent=27 // pred_check_branch
          %155 = sbr.rel (%p153) target = $region32
        $region31: #{tpu_custom_call.1} parent=27 // pred_region
          %156 = dma.done %s149, 2048
        $region32: #{tpu_custom_call.1} parent=27 // pred_fallthru
          _
        // Predicated region
        $region33: #{tpu_custom_call.1} parent=27 // pred_check
          %p157 = pneg %p62
        $region34: #{tpu_custom_call.1} parent=27 // pred_check_branch
          %159 = sbr.rel (%p157) target = $region36
        $region35: #{tpu_custom_call.1} parent=27 // pred_region
          %160 = dma.done [#allocation6], 20608
        $region36: #{tpu_custom_call.1} parent=27 // pred_fallthru
          _
        %s161 = sand.u32 %s28, 1
        %s162 = scalar_lea.sflag [#allocation3], %s161
        %s163 = sand.u32 %s28, 1
        %s164 = smul.addr %s163, 128
        %s165 = scalar_lea.vmem [#allocation2], %s164
        %p166 = pneg %p41
        %p167 = pneg %p38
        %p168 = pneg %p62
        %p169 = pneg %p59
        %p170 = pneg %p88
        %p171 = pneg %p85
        %s172 = sand.u32 %s75, 1
        %s173 = scalar_lea.sflag [#allocation4], %s172
        %s174 = sand.u32 %s75, 1
        %s175 = smul.addr %s174, 128
        %s176 = scalar_lea.vmem [#allocation7], %s175
        %s177 = smul.u32 16, %s20
        %s178 = smul.u32 16, %s20
        %v179 = vld [vmem:[%s152] sm:$0xff]
        %v180 = vld [vmem:[%s152 + $0x8] sm:$0xff]
        %v181 = vld [vmem:[%s152 + $0x10] sm:$0xff]
        %v182 = vld [vmem:[%s152 + $0x18] sm:$0xff]
        %v183 = vld [vmem:[%s152 + $0x20] sm:$0xff]
        %v184 = vld [vmem:[%s152 + $0x28] sm:$0xff]
        %v185 = vld [vmem:[%s152 + $0x30] sm:$0xff]
        %v186 = vld [vmem:[%s152 + $0x38] sm:$0xff]
        %v187 = vld [vmem:[%s152 + $0x40] sm:$0xff]
        %v188 = vld [vmem:[%s152 + $0x48] sm:$0xff]
        %v189 = vld [vmem:[%s152 + $0x50] sm:$0xff]
        %v190 = vld [vmem:[%s152 + $0x58] sm:$0xff]
        %v191 = vld [vmem:[%s152 + $0x60] sm:$0xff]
        %v192 = vld [vmem:[%s152 + $0x68] sm:$0xff]
        %v193 = vld [vmem:[%s152 + $0x70] sm:$0xff]
        %v194 = vld [vmem:[%s152 + $0x78] sm:$0xff]
        %v195 = vld [vmem:[#allocation5] sm:$0xff]
        %v196 = vld [vmem:[#allocation5 + $0x8] sm:$0xff]
        %v197 = vld [vmem:[#allocation5 + $0x10] sm:$0xff]
        %v198 = vld [vmem:[#allocation5 + $0x18] sm:$0xff]
        %v199 = vld [vmem:[#allocation5 + $0x20] sm:$0xff]
        %v200 = vld [vmem:[#allocation5 + $0x28] sm:$0xff]
        %v201 = vld [vmem:[#allocation5 + $0x30] sm:$0xff]
        %v202 = vld [vmem:[#allocation5 + $0x38] sm:$0xff]
        %v203 = vld [vmem:[#allocation5 + $0x40] sm:$0xff]
        %v204 = vld [vmem:[#allocation5 + $0x48] sm:$0xff]
        %v205 = vld [vmem:[#allocation5 + $0x50] sm:$0xff]
        %v206 = vld [vmem:[#allocation5 + $0x58] sm:$0xff]
        %v207 = vld [vmem:[#allocation5 + $0x60] sm:$0xff]
        %v208 = vld [vmem:[#allocation5 + $0x68] sm:$0xff]
        %v209 = vld [vmem:[#allocation5 + $0x70] sm:$0xff]
        %v210 = vld [vmem:[#allocation5 + $0x78] sm:$0xff]
        %v211 = vld [vmem:[#allocation5 + $0x500] sm:$0x1]
        %v212 = vlaneseq
        %v213 = vshrl.u32 %v212, 7
        %v214 = vsub.s32 0, %v213
        %v215 = vrot.slane %v211, %v214
        %216 = vmatprep.subr.mxu0 0.0
        %217 = vmatpush1.msra.mxu0 %v195
        %218 = vmatprep.subr.mxu0 0.0
        %219 = vmatpush1.msra.mxu0 %v196
        %220 = vmatprep.subr.mxu0 0.0
        %221 = vmatpush1.msra.mxu0 %v197
        %222 = vmatprep.subr.mxu0 0.0
        %223 = vmatpush1.msra.mxu0 %v198
        %224 = vmatprep.subr.mxu0 0.0
        %225 = vmatpush1.msra.mxu0 %v199
        %226 = vmatprep.subr.mxu0 0.0
        %227 = vmatpush1.msra.mxu0 %v200
        %228 = vmatprep.subr.mxu0 0.0
        %229 = vmatpush1.msra.mxu0 %v201
        %230 = vmatprep.subr.mxu0 0.0
        %231 = vmatpush1.msra.mxu0 %v202
        %232 = vmatprep.subr.mxu0 0.0
        %233 = vmatpush1.msra.mxu0 %v203
        %234 = vmatprep.subr.mxu0 0.0
        %235 = vmatpush1.msra.mxu0 %v204
        %236 = vmatprep.subr.mxu0 0.0
        %237 = vmatpush1.msra.mxu0 %v205
        %238 = vmatprep.subr.mxu0 0.0
        %239 = vmatpush1.msra.mxu0 %v206
        %240 = vmatprep.subr.mxu0 0.0
        %241 = vmatpush1.msra.mxu0 %v207
        %242 = vmatprep.subr.mxu0 0.0
        %243 = vmatpush1.msra.mxu0 %v208
        %244 = vmatprep.subr.mxu0 0.0
        %245 = vmatpush1.msra.mxu0 %v209
        %246 = vmatprep.subr.mxu0 0.0
        %247 = vmatpush1.msra.mxu0 %v210
        %248 = vmatprep.subr.mxu0 0.0
        %249 = vmatpush1.msra.mxu0 0.0
        %250 = vmatprep.subr.mxu0 0.0
        %251 = vmatpush1.msra.mxu0 0.0
        %252 = vmatprep.subr.mxu0 0.0
        %253 = vmatpush1.msra.mxu0 0.0
        %254 = vmatprep.subr.mxu0 0.0
        %255 = vmatpush1.msra.mxu0 0.0
        %256 = vmatprep.subr.mxu0 0.0
        %257 = vmatpush1.msra.mxu0 0.0
        %258 = vmatprep.subr.mxu0 0.0
        %259 = vmatpush1.msra.mxu0 0.0
        %260 = vmatprep.subr.mxu0 0.0
        %261 = vmatpush1.msra.mxu0 0.0
        %262 = vmatprep.subr.mxu0 0.0
        %263 = vmatpush1.msra.mxu0 0.0
        %264 = vmatprep.subr.mxu0 0.0
        %265 = vmatpush1.msra.mxu0 0.0
        %266 = vmatprep.subr.mxu0 0.0
        %267 = vmatpush1.msra.mxu0 0.0
        %268 = vmatprep.subr.mxu0 0.0
        %269 = vmatpush1.msra.mxu0 0.0
        %270 = vmatprep.subr.mxu0 0.0
        %271 = vmatpush1.msra.mxu0 0.0
        %272 = vmatprep.subr.mxu0 0.0
        %273 = vmatpush1.msra.mxu0 0.0
        %274 = vmatprep.subr.mxu0 0.0
        %275 = vmatpush1.msra.mxu0 0.0
        %276 = vmatprep.subr.mxu0 0.0
        %277 = vmatpush1.msra.mxu0 0.0
        %278 = vmatprep.subr.mxu0 0.0
        %279 = vmatpush1.msra.mxu0 0.0
        %280 = vmatprep.mubr.f32.mxu0 0.0
        %281 = vmatmul.mubr.f32.gmra.mrb[0].mxu0 %v179
        %v282 = vpop.f32.mrb[0].mxu0
        %v283 = vadd.f32 %v215, %v282
        %v284 = vpop.f32.mrb[0].mxu0
        %285 = vmatprep.mubr.f32.mxu0 0.0
        %286 = vmatmul.mubr.f32.gmra.mrb[0].mxu0 %v180
        %v287 = vpop.f32.mrb[0].mxu0
        %v288 = vadd.f32 %v215, %v287
        %v289 = vpop.f32.mrb[0].mxu0
        %290 = vmatprep.mubr.f32.mxu0 0.0
        %291 = vmatmul.mubr.f32.gmra.mrb[0].mxu0 %v181
        %v292 = vpop.f32.mrb[0].mxu0
        %v293 = vadd.f32 %v215, %v292
        %v294 = vpop.f32.mrb[0].mxu0
        %295 = vmatprep.mubr.f32.mxu0 0.0
        %296 = vmatmul.mubr.f32.gmra.mrb[0].mxu0 %v182
        %v297 = vpop.f32.mrb[0].mxu0
        %v298 = vadd.f32 %v215, %v297
        %v299 = vpop.f32.mrb[0].mxu0
        %300 = vmatprep.mubr.f32.mxu0 0.0
        %301 = vmatmul.mubr.f32.gmra.mrb[0].mxu0 %v183
        %v302 = vpop.f32.mrb[0].mxu0
        %v303 = vadd.f32 %v215, %v302
        %v304 = vpop.f32.mrb[0].mxu0
        %305 = vmatprep.mubr.f32.mxu0 0.0
        %306 = vmatmul.mubr.f32.gmra.mrb[0].mxu0 %v184
        %v307 = vpop.f32.mrb[0].mxu0
        %v308 = vadd.f32 %v215, %v307
        %v309 = vpop.f32.mrb[0].mxu0
        %310 = vmatprep.mubr.f32.mxu0 0.0
        %311 = vmatmul.mubr.f32.gmra.mrb[0].mxu0 %v185
        %v312 = vpop.f32.mrb[0].mxu0
        %v313 = vadd.f32 %v215, %v312
        %v314 = vpop.f32.mrb[0].mxu0
        %315 = vmatprep.mubr.f32.mxu0 0.0
        %316 = vmatmul.mubr.f32.gmra.mrb[0].mxu0 %v186
        %v317 = vpop.f32.mrb[0].mxu0
        %v318 = vadd.f32 %v215, %v317
        %v319 = vpop.f32.mrb[0].mxu0
        %320 = vmatprep.mubr.f32.mxu0 0.0
        %321 = vmatmul.mubr.f32.gmra.mrb[0].mxu0 %v187
        %v322 = vpop.f32.mrb[0].mxu0
        %v323 = vadd.f32 %v215, %v322
        %v324 = vpop.f32.mrb[0].mxu0
        %325 = vmatprep.mubr.f32.mxu0 0.0
        %326 = vmatmul.mubr.f32.gmra.mrb[0].mxu0 %v188
        %v327 = vpop.f32.mrb[0].mxu0
        %v328 = vadd.f32 %v215, %v327
        %v329 = vpop.f32.mrb[0].mxu0
        %330 = vmatprep.mubr.f32.mxu0 0.0
        %331 = vmatmul.mubr.f32.gmra.mrb[0].mxu0 %v189
        %v332 = vpop.f32.mrb[0].mxu0
        %v333 = vadd.f32 %v215, %v332
        %v334 = vpop.f32.mrb[0].mxu0
        %335 = vmatprep.mubr.f32.mxu0 0.0
        %336 = vmatmul.mubr.f32.gmra.mrb[0].mxu0 %v190
        %v337 = vpop.f32.mrb[0].mxu0
        %v338 = vadd.f32 %v215, %v337
        %v339 = vpop.f32.mrb[0].mxu0
        %340 = vmatprep.mubr.f32.mxu0 0.0
        %341 = vmatmul.mubr.f32.gmra.mrb[0].mxu0 %v191
        %v342 = vpop.f32.mrb[0].mxu0
        %v343 = vadd.f32 %v215, %v342
        %v344 = vpop.f32.mrb[0].mxu0
        %345 = vmatprep.mubr.f32.mxu0 0.0
        %346 = vmatmul.mubr.f32.gmra.mrb[0].mxu0 %v192
        %v347 = vpop.f32.mrb[0].mxu0
        %v348 = vadd.f32 %v215, %v347
        %v349 = vpop.f32.mrb[0].mxu0
        %350 = vmatprep.mubr.f32.mxu0 0.0
        %351 = vmatmul.mubr.f32.gmra.mrb[0].mxu0 %v193
        %v352 = vpop.f32.mrb[0].mxu0
        %v353 = vadd.f32 %v215, %v352
        %v354 = vpop.f32.mrb[0].mxu0
        %355 = vmatprep.mubr.f32.mxu0 0.0
        %356 = vmatmul.mubr.f32.gmra.mrb[0].mxu0 %v194
        %v357 = vpop.f32.mrb[0].mxu0
        %v358 = vadd.f32 %v215, %v357
        %v359 = vpop.f32.mrb[0].mxu0
        %360 = vdwg.mxu0
        %v361 = vmax.f32 %v283, 0.0
        %v362 = vmax.f32 %v288, 0.0
        %v363 = vmax.f32 %v293, 0.0
        %v364 = vmax.f32 %v298, 0.0
        %v365 = vmax.f32 %v303, 0.0
        %v366 = vmax.f32 %v308, 0.0
        %v367 = vmax.f32 %v313, 0.0
        %v368 = vmax.f32 %v318, 0.0
        %v369 = vmax.f32 %v323, 0.0
        %v370 = vmax.f32 %v328, 0.0
        %v371 = vmax.f32 %v333, 0.0
        %v372 = vmax.f32 %v338, 0.0
        %v373 = vmax.f32 %v343, 0.0
        %v374 = vmax.f32 %v348, 0.0
        %v375 = vmax.f32 %v353, 0.0
        %v376 = vmax.f32 %v358, 0.0
        %v377 = vadd.f32 %v179, %v361
        %v378 = vadd.f32 %v180, %v362
        %v379 = vadd.f32 %v181, %v363
        %v380 = vadd.f32 %v182, %v364
        %v381 = vadd.f32 %v183, %v365
        %v382 = vadd.f32 %v184, %v366
        %v383 = vadd.f32 %v185, %v367
        %v384 = vadd.f32 %v186, %v368
        %v385 = vadd.f32 %v187, %v369
        %v386 = vadd.f32 %v188, %v370
        %v387 = vadd.f32 %v189, %v371
        %v388 = vadd.f32 %v190, %v372
        %v389 = vadd.f32 %v191, %v373
        %v390 = vadd.f32 %v192, %v374
        %v391 = vadd.f32 %v193, %v375
        %v392 = vadd.f32 %v194, %v376
        %v393 = vld [vmem:[#allocation5 + $0x80] sm:$0xff]
        %v394 = vld [vmem:[#allocation5 + $0x88] sm:$0xff]
        %v395 = vld [vmem:[#allocation5 + $0x90] sm:$0xff]
        %v396 = vld [vmem:[#allocation5 + $0x98] sm:$0xff]
        %v397 = vld [vmem:[#allocation5 + $0xa0] sm:$0xff]
        %v398 = vld [vmem:[#allocation5 + $0xa8] sm:$0xff]
        %v399 = vld [vmem:[#allocation5 + $0xb0] sm:$0xff]
        %v400 = vld [vmem:[#allocation5 + $0xb8] sm:$0xff]
        %v401 = vld [vmem:[#allocation5 + $0xc0] sm:$0xff]
        %v402 = vld [vmem:[#allocation5 + $0xc8] sm:$0xff]
        %v403 = vld [vmem:[#allocation5 + $0xd0] sm:$0xff]
        %v404 = vld [vmem:[#allocation5 + $0xd8] sm:$0xff]
        %v405 = vld [vmem:[#allocation5 + $0xe0] sm:$0xff]
        %v406 = vld [vmem:[#allocation5 + $0xe8] sm:$0xff]
        %v407 = vld [vmem:[#allocation5 + $0xf0] sm:$0xff]
        %v408 = vld [vmem:[#allocation5 + $0xf8] sm:$0xff]
        %v409 = vld [vmem:[#allocation5 + $0x501] sm:$0x1]
        %v410 = vlaneseq
        %v411 = vshrl.u32 %v410, 7
        %v412 = vsub.s32 0, %v411
        %v413 = vrot.slane %v409, %v412
        %414 = vmatprep.subr.mxu0 0.0
        %415 = vmatpush1.msra.mxu0 %v393
        %416 = vmatprep.subr.mxu0 0.0
        %417 = vmatpush1.msra.mxu0 %v394
        %418 = vmatprep.subr.mxu0 0.0
        %419 = vmatpush1.msra.mxu0 %v395
        %420 = vmatprep.subr.mxu0 0.0
        %421 = vmatpush1.msra.mxu0 %v396
        %422 = vmatprep.subr.mxu0 0.0
        %423 = vmatpush1.msra.mxu0 %v397
        %424 = vmatprep.subr.mxu0 0.0
        %425 = vmatpush1.msra.mxu0 %v398
        %426 = vmatprep.subr.mxu0 0.0
        %427 = vmatpush1.msra.mxu0 %v399
        %428 = vmatprep.subr.mxu0 0.0
        %429 = vmatpush1.msra.mxu0 %v400
        %430 = vmatprep.subr.mxu0 0.0
        %431 = vmatpush1.msra.mxu0 %v401
        %432 = vmatprep.subr.mxu0 0.0
        %433 = vmatpush1.msra.mxu0 %v402
        %434 = vmatprep.subr.mxu0 0.0
        %435 = vmatpush1.msra.mxu0 %v403
        %436 = vmatprep.subr.mxu0 0.0
        %437 = vmatpush1.msra.mxu0 %v404
        %438 = vmatprep.subr.mxu0 0.0
        %439 = vmatpush1.msra.mxu0 %v405
        %440 = vmatprep.subr.mxu0 0.0
        %441 = vmatpush1.msra.mxu0 %v406
        %442 = vmatprep.subr.mxu0 0.0
        %443 = vmatpush1.msra.mxu0 %v407
        %444 = vmatprep.subr.mxu0 0.0
        %445 = vmatpush1.msra.mxu0 %v408
        %446 = vmatprep.subr.mxu0 0.0
        %447 = vmatpush1.msra.mxu0 0.0
        %448 = vmatprep.subr.mxu0 0.0
        %449 = vmatpush1.msra.mxu0 0.0
        %450 = vmatprep.subr.mxu0 0.0
        %451 = vmatpush1.msra.mxu0 0.0
        %452 = vmatprep.subr.mxu0 0.0
        %453 = vmatpush1.msra.mxu0 0.0
        %454 = vmatprep.subr.mxu0 0.0
        %455 = vmatpush1.msra.mxu0 0.0
        %456 = vmatprep.subr.mxu0 0.0
        %457 = vmatpush1.msra.mxu0 0.0
        %458 = vmatprep.subr.mxu0 0.0
        %459 = vmatpush1.msra.mxu0 0.0
        %460 = vmatprep.subr.mxu0 0.0
        %461 = vmatpush1.msra.mxu0 0.0
        %462 = vmatprep.subr.mxu0 0.0
        %463 = vmatpush1.msra.mxu0 0.0
        %464 = vmatprep.subr.mxu0 0.0
        %465 = vmatpush1.msra.mxu0 0.0
        %466 = vmatprep.subr.mxu0 0.0
        %467 = vmatpush1.msra.mxu0 0.0
        %468 = vmatprep.subr.mxu0 0.0
        %469 = vmatpush1.msra.mxu0 0.0
        %470 = vmatprep.subr.mxu0 0.0
        %471 = vmatpush1.msra.mxu0 0.0
        %472 = vmatprep.subr.mxu0 0.0
        %473 = vmatpush1.msra.mxu0 0.0
        %474 = vmatprep.subr.mxu0 0.0
        %475 = vmatpush1.msra.mxu0 0.0
        %476 = vmatprep.subr.mxu0 0.0
        %477 = vmatpush1.msra.mxu0 0.0
        %478 = vmatprep.mubr.f32.mxu0 0.0
        %479 = vmatmul.mubr.f32.gmra.mrb[0].mxu0 %v377
        %v480 = vpop.f32.mrb[0].mxu0
        %v481 = vadd.f32 %v413, %v480
        %v482 = vpop.f32.mrb[0].mxu0
        %483 = vmatprep.mubr.f32.mxu0 0.0
        %484 = vmatmul.mubr.f32.gmra.mrb[0].mxu0 %v378
        %v485 = vpop.f32.mrb[0].mxu0
        %v486 = vadd.f32 %v413, %v485
        %v487 = vpop.f32.mrb[0].mxu0
        %488 = vmatprep.mubr.f32.mxu0 0.0
        %489 = vmatmul.mubr.f32.gmra.mrb[0].mxu0 %v379
        %v490 = vpop.f32.mrb[0].mxu0
        %v491 = vadd.f32 %v413, %v490
        %v492 = vpop.f32.mrb[0].mxu0
        %493 = vmatprep.mubr.f32.mxu0 0.0
        %494 = vmatmul.mubr.f32.gmra.mrb[0].mxu0 %v380
        %v495 = vpop.f32.mrb[0].mxu0
        %v496 = vadd.f32 %v413, %v495
        %v497 = vpop.f32.mrb[0].mxu0
        %498 = vmatprep.mubr.f32.mxu0 0.0
        %499 = vmatmul.mubr.f32.gmra.mrb[0].mxu0 %v381
        %v500 = vpop.f32.mrb[0].mxu0
        %v501 = vadd.f32 %v413, %v500
        %v502 = vpop.f32.mrb[0].mxu0
        %503 = vmatprep.mubr.f32.mxu0 0.0
        %504 = vmatmul.mubr.f32.gmra.mrb[0].mxu0 %v382
        %v505 = vpop.f32.mrb[0].mxu0
        %v506 = vadd.f32 %v413, %v505
        %v507 = vpop.f32.mrb[0].mxu0
        %508 = vmatprep.mubr.f32.mxu0 0.0
        %509 = vmatmul.mubr.f32.gmra.mrb[0].mxu0 %v383
        %v510 = vpop.f32.mrb[0].mxu0
        %v511 = vadd.f32 %v413, %v510
        %v512 = vpop.f32.mrb[0].mxu0
        %513 = vmatprep.mubr.f32.mxu0 0.0
        %514 = vmatmul.mubr.f32.gmra.mrb[0].mxu0 %v384
        %v515 = vpop.f32.mrb[0].mxu0
        %v516 = vadd.f32 %v413, %v515
        %v517 = vpop.f32.mrb[0].mxu0
        %518 = vmatprep.mubr.f32.mxu0 0.0
        %519 = vmatmul.mubr.f32.gmra.mrb[0].mxu0 %v385
        %v520 = vpop.f32.mrb[0].mxu0
        %v521 = vadd.f32 %v413, %v520
        %v522 = vpop.f32.mrb[0].mxu0
        %523 = vmatprep.mubr.f32.mxu0 0.0
        %524 = vmatmul.mubr.f32.gmra.mrb[0].mxu0 %v386
        %v525 = vpop.f32.mrb[0].mxu0
        %v526 = vadd.f32 %v413, %v525
        %v527 = vpop.f32.mrb[0].mxu0
        %528 = vmatprep.mubr.f32.mxu0 0.0
        %529 = vmatmul.mubr.f32.gmra.mrb[0].mxu0 %v387
        %v530 = vpop.f32.mrb[0].mxu0
        %v531 = vadd.f32 %v413, %v530
        %v532 = vpop.f32.mrb[0].mxu0
        %533 = vmatprep.mubr.f32.mxu0 0.0
        %534 = vmatmul.mubr.f32.gmra.mrb[0].mxu0 %v388
        %v535 = vpop.f32.mrb[0].mxu0
        %v536 = vadd.f32 %v413, %v535
        %v537 = vpop.f32.mrb[0].mxu0
        %538 = vmatprep.mubr.f32.mxu0 0.0
        %539 = vmatmul.mubr.f32.gmra.mrb[0].mxu0 %v389
        %v540 = vpop.f32.mrb[0].mxu0
        %v541 = vadd.f32 %v413, %v540
        %v542 = vpop.f32.mrb[0].mxu0
        %543 = vmatprep.mubr.f32.mxu0 0.0
        %544 = vmatmul.mubr.f32.gmra.mrb[0].mxu0 %v390
        %v545 = vpop.f32.mrb[0].mxu0
        %v546 = vadd.f32 %v413, %v545
        %v547 = vpop.f32.mrb[0].mxu0
        %548 = vmatprep.mubr.f32.mxu0 0.0
        %549 = vmatmul.mubr.f32.gmra.mrb[0].mxu0 %v391
        %v550 = vpop.f32.mrb[0].mxu0
        %v551 = vadd.f32 %v413, %v550
        %v552 = vpop.f32.mrb[0].mxu0
        %553 = vmatprep.mubr.f32.mxu0 0.0
        %554 = vmatmul.mubr.f32.gmra.mrb[0].mxu0 %v392
        %v555 = vpop.f32.mrb[0].mxu0
        %v556 = vadd.f32 %v413, %v555
        %v557 = vpop.f32.mrb[0].mxu0
        %558 = vdwg.mxu0
        %v559 = vmax.f32 %v481, 0.0
        %v560 = vmax.f32 %v486, 0.0
        %v561 = vmax.f32 %v491, 0.0
        %v562 = vmax.f32 %v496, 0.0
        %v563 = vmax.f32 %v501, 0.0
        %v564 = vmax.f32 %v506, 0.0
        %v565 = vmax.f32 %v511, 0.0
        %v566 = vmax.f32 %v516, 0.0
        %v567 = vmax.f32 %v521, 0.0
        %v568 = vmax.f32 %v526, 0.0
        %v569 = vmax.f32 %v531, 0.0
        %v570 = vmax.f32 %v536, 0.0
        %v571 = vmax.f32 %v541, 0.0
        %v572 = vmax.f32 %v546, 0.0
        %v573 = vmax.f32 %v551, 0.0
        %v574 = vmax.f32 %v556, 0.0
        %v575 = vadd.f32 %v377, %v559
        %v576 = vadd.f32 %v378, %v560
        %v577 = vadd.f32 %v379, %v561
        %v578 = vadd.f32 %v380, %v562
        %v579 = vadd.f32 %v381, %v563
        %v580 = vadd.f32 %v382, %v564
        %v581 = vadd.f32 %v383, %v565
        %v582 = vadd.f32 %v384, %v566
        %v583 = vadd.f32 %v385, %v567
        %v584 = vadd.f32 %v386, %v568
        %v585 = vadd.f32 %v387, %v569
        %v586 = vadd.f32 %v388, %v570
        %v587 = vadd.f32 %v389, %v571
        %v588 = vadd.f32 %v390, %v572
        %v589 = vadd.f32 %v391, %v573
        %v590 = vadd.f32 %v392, %v574
        %v591 = vld [vmem:[#allocation5 + $0x100] sm:$0xff]
        %v592 = vld [vmem:[#allocation5 + $0x108] sm:$0xff]
        %v593 = vld [vmem:[#allocation5 + $0x110] sm:$0xff]
        %v594 = vld [vmem:[#allocation5 + $0x118] sm:$0xff]
        %v595 = vld [vmem:[#allocation5 + $0x120] sm:$0xff]
        %v596 = vld [vmem:[#allocation5 + $0x128] sm:$0xff]
        %v597 = vld [vmem:[#allocation5 + $0x130] sm:$0xff]
        %v598 = vld [vmem:[#allocation5 + $0x138] sm:$0xff]
        %v599 = vld [vmem:[#allocation5 + $0x140] sm:$0xff]
        %v600 = vld [vmem:[#allocation5 + $0x148] sm:$0xff]
        %v601 = vld [vmem:[#allocation5 + $0x150] sm:$0xff]
        %v602 = vld [vmem:[#allocation5 + $0x158] sm:$0xff]
        %v603 = vld [vmem:[#allocation5 + $0x160] sm:$0xff]
        %v604 = vld [vmem:[#allocation5 + $0x168] sm:$0xff]
        %v605 = vld [vmem:[#allocation5 + $0x170] sm:$0xff]
        %v606 = vld [vmem:[#allocation5 + $0x178] sm:$0xff]
        %v607 = vld [vmem:[#allocation5 + $0x502] sm:$0x1]
        %v608 = vlaneseq
        %v609 = vshrl.u32 %v608, 7
        %v610 = vsub.s32 0, %v609
        %v611 = vrot.slane %v607, %v610
        %612 = vmatprep.subr.mxu0 0.0
        %613 = vmatpush1.msra.mxu0 %v591
        %614 = vmatprep.subr.mxu0 0.0
        %615 = vmatpush1.msra.mxu0 %v592
        %616 = vmatprep.subr.mxu0 0.0
        %617 = vmatpush1.msra.mxu0 %v593
        %618 = vmatprep.subr.mxu0 0.0
        %619 = vmatpush1.msra.mxu0 %v594
        %620 = vmatprep.subr.mxu0 0.0
        %621 = vmatpush1.msra.mxu0 %v595
        %622 = vmatprep.subr.mxu0 0.0
        %623 = vmatpush1.msra.mxu0 %v596
        %624 = vmatprep.subr.mxu0 0.0
        %625 = vmatpush1.msra.mxu0 %v597
        %626 = vmatprep.subr.mxu0 0.0
        %627 = vmatpush1.msra.mxu0 %v598
        %628 = vmatprep.subr.mxu0 0.0
        %629 = vmatpush1.msra.mxu0 %v599
        %630 = vmatprep.subr.mxu0 0.0
        %631 = vmatpush1.msra.mxu0 %v600
        %632 = vmatprep.subr.mxu0 0.0
        %633 = vmatpush1.msra.mxu0 %v601
        %634 = vmatprep.subr.mxu0 0.0
        %635 = vmatpush1.msra.mxu0 %v602
        %636 = vmatprep.subr.mxu0 0.0
        %637 = vmatpush1.msra.mxu0 %v603
        %638 = vmatprep.subr.mxu0 0.0
        %639 = vmatpush1.msra.mxu0 %v604
        %640 = vmatprep.subr.mxu0 0.0
        %641 = vmatpush1.msra.mxu0 %v605
        %642 = vmatprep.subr.mxu0 0.0
        %643 = vmatpush1.msra.mxu0 %v606
        %644 = vmatprep.subr.mxu0 0.0
        %645 = vmatpush1.msra.mxu0 0.0
        %646 = vmatprep.subr.mxu0 0.0
        %647 = vmatpush1.msra.mxu0 0.0
        %648 = vmatprep.subr.mxu0 0.0
        %649 = vmatpush1.msra.mxu0 0.0
        %650 = vmatprep.subr.mxu0 0.0
        %651 = vmatpush1.msra.mxu0 0.0
        %652 = vmatprep.subr.mxu0 0.0
        %653 = vmatpush1.msra.mxu0 0.0
        %654 = vmatprep.subr.mxu0 0.0
        %655 = vmatpush1.msra.mxu0 0.0
        %656 = vmatprep.subr.mxu0 0.0
        %657 = vmatpush1.msra.mxu0 0.0
        %658 = vmatprep.subr.mxu0 0.0
        %659 = vmatpush1.msra.mxu0 0.0
        %660 = vmatprep.subr.mxu0 0.0
        %661 = vmatpush1.msra.mxu0 0.0
        %662 = vmatprep.subr.mxu0 0.0
        %663 = vmatpush1.msra.mxu0 0.0
        %664 = vmatprep.subr.mxu0 0.0
        %665 = vmatpush1.msra.mxu0 0.0
        %666 = vmatprep.subr.mxu0 0.0
        %667 = vmatpush1.msra.mxu0 0.0
        %668 = vmatprep.subr.mxu0 0.0
        %669 = vmatpush1.msra.mxu0 0.0
        %670 = vmatprep.subr.mxu0 0.0
        %671 = vmatpush1.msra.mxu0 0.0
        %672 = vmatprep.subr.mxu0 0.0
        %673 = vmatpush1.msra.mxu0 0.0
        %674 = vmatprep.subr.mxu0 0.0
        %675 = vmatpush1.msra.mxu0 0.0
        %676 = vmatprep.mubr.f32.mxu0 0.0
        %677 = vmatmul.mubr.f32.gmra.mrb[0].mxu0 %v575
        %v678 = vpop.f32.mrb[0].mxu0
        %v679 = vadd.f32 %v611, %v678
        %v680 = vpop.f32.mrb[0].mxu0
        %681 = vmatprep.mubr.f32.mxu0 0.0
        %682 = vmatmul.mubr.f32.gmra.mrb[0].mxu0 %v576
        %v683 = vpop.f32.mrb[0].mxu0
        %v684 = vadd.f32 %v611, %v683
        %v685 = vpop.f32.mrb[0].mxu0
        %686 = vmatprep.mubr.f32.mxu0 0.0
        %687 = vmatmul.mubr.f32.gmra.mrb[0].mxu0 %v577
        %v688 = vpop.f32.mrb[0].mxu0
        %v689 = vadd.f32 %v611, %v688
        %v690 = vpop.f32.mrb[0].mxu0
        %691 = vmatprep.mubr.f32.mxu0 0.0
        %692 = vmatmul.mubr.f32.gmra.mrb[0].mxu0 %v578
        %v693 = vpop.f32.mrb[0].mxu0
        %v694 = vadd.f32 %v611, %v693
        %v695 = vpop.f32.mrb[0].mxu0
        %696 = vmatprep.mubr.f32.mxu0 0.0
        %697 = vmatmul.mubr.f32.gmra.mrb[0].mxu0 %v579
        %v698 = vpop.f32.mrb[0].mxu0
        %v699 = vadd.f32 %v611, %v698
        %v700 = vpop.f32.mrb[0].mxu0
        %701 = vmatprep.mubr.f32.mxu0 0.0
        %702 = vmatmul.mubr.f32.gmra.mrb[0].mxu0 %v580
        %v703 = vpop.f32.mrb[0].mxu0
        %v704 = vadd.f32 %v611, %v703
        %v705 = vpop.f32.mrb[0].mxu0
        %706 = vmatprep.mubr.f32.mxu0 0.0
        %707 = vmatmul.mubr.f32.gmra.mrb[0].mxu0 %v581
        %v708 = vpop.f32.mrb[0].mxu0
        %v709 = vadd.f32 %v611, %v708
        %v710 = vpop.f32.mrb[0].mxu0
        %711 = vmatprep.mubr.f32.mxu0 0.0
        %712 = vmatmul.mubr.f32.gmra.mrb[0].mxu0 %v582
        %v713 = vpop.f32.mrb[0].mxu0
        %v714 = vadd.f32 %v611, %v713
        %v715 = vpop.f32.mrb[0].mxu0
        %716 = vmatprep.mubr.f32.mxu0 0.0
        %717 = vmatmul.mubr.f32.gmra.mrb[0].mxu0 %v583
        %v718 = vpop.f32.mrb[0].mxu0
        %v719 = vadd.f32 %v611, %v718
        %v720 = vpop.f32.mrb[0].mxu0
        %721 = vmatprep.mubr.f32.mxu0 0.0
        %722 = vmatmul.mubr.f32.gmra.mrb[0].mxu0 %v584
        %v723 = vpop.f32.mrb[0].mxu0
        %v724 = vadd.f32 %v611, %v723
        %v725 = vpop.f32.mrb[0].mxu0
        %726 = vmatprep.mubr.f32.mxu0 0.0
        %727 = vmatmul.mubr.f32.gmra.mrb[0].mxu0 %v585
        %v728 = vpop.f32.mrb[0].mxu0
        %v729 = vadd.f32 %v611, %v728
        %v730 = vpop.f32.mrb[0].mxu0
        %731 = vmatprep.mubr.f32.mxu0 0.0
        %732 = vmatmul.mubr.f32.gmra.mrb[0].mxu0 %v586
        %v733 = vpop.f32.mrb[0].mxu0
        %v734 = vadd.f32 %v611, %v733
        %v735 = vpop.f32.mrb[0].mxu0
        %736 = vmatprep.mubr.f32.mxu0 0.0
        %737 = vmatmul.mubr.f32.gmra.mrb[0].mxu0 %v587
        %v738 = vpop.f32.mrb[0].mxu0
        %v739 = vadd.f32 %v611, %v738
        %v740 = vpop.f32.mrb[0].mxu0
        %741 = vmatprep.mubr.f32.mxu0 0.0
        %742 = vmatmul.mubr.f32.gmra.mrb[0].mxu0 %v588
        %v743 = vpop.f32.mrb[0].mxu0
        %v744 = vadd.f32 %v611, %v743
        %v745 = vpop.f32.mrb[0].mxu0
        %746 = vmatprep.mubr.f32.mxu0 0.0
        %747 = vmatmul.mubr.f32.gmra.mrb[0].mxu0 %v589
        %v748 = vpop.f32.mrb[0].mxu0
        %v749 = vadd.f32 %v611, %v748
        %v750 = vpop.f32.mrb[0].mxu0
        %751 = vmatprep.mubr.f32.mxu0 0.0
        %752 = vmatmul.mubr.f32.gmra.mrb[0].mxu0 %v590
        %v753 = vpop.f32.mrb[0].mxu0
        %v754 = vadd.f32 %v611, %v753
        %v755 = vpop.f32.mrb[0].mxu0
        %756 = vdwg.mxu0
        %v757 = vmax.f32 %v679, 0.0
        %v758 = vmax.f32 %v684, 0.0
        %v759 = vmax.f32 %v689, 0.0
        %v760 = vmax.f32 %v694, 0.0
        %v761 = vmax.f32 %v699, 0.0
        %v762 = vmax.f32 %v704, 0.0
        %v763 = vmax.f32 %v709, 0.0
        %v764 = vmax.f32 %v714, 0.0
        %v765 = vmax.f32 %v719, 0.0
        %v766 = vmax.f32 %v724, 0.0
        %v767 = vmax.f32 %v729, 0.0
        %v768 = vmax.f32 %v734, 0.0
        %v769 = vmax.f32 %v739, 0.0
        %v770 = vmax.f32 %v744, 0.0
        %v771 = vmax.f32 %v749, 0.0
        %v772 = vmax.f32 %v754, 0.0
        %v773 = vld [vmem:[#allocation5 + $0x180] sm:$0xff]
        %v774 = vld [vmem:[#allocation5 + $0x188] sm:$0xff]
        %v775 = vld [vmem:[#allocation5 + $0x190] sm:$0xff]
        %v776 = vld [vmem:[#allocation5 + $0x198] sm:$0xff]
        %v777 = vld [vmem:[#allocation5 + $0x1a0] sm:$0xff]
        %v778 = vld [vmem:[#allocation5 + $0x1a8] sm:$0xff]
        %v779 = vld [vmem:[#allocation5 + $0x1b0] sm:$0xff]
        %v780 = vld [vmem:[#allocation5 + $0x1b8] sm:$0xff]
        %v781 = vld [vmem:[#allocation5 + $0x1c0] sm:$0xff]
        %v782 = vld [vmem:[#allocation5 + $0x1c8] sm:$0xff]
        %v783 = vld [vmem:[#allocation5 + $0x1d0] sm:$0xff]
        %v784 = vld [vmem:[#allocation5 + $0x1d8] sm:$0xff]
        %v785 = vld [vmem:[#allocation5 + $0x1e0] sm:$0xff]
        %v786 = vld [vmem:[#allocation5 + $0x1e8] sm:$0xff]
        %v787 = vld [vmem:[#allocation5 + $0x1f0] sm:$0xff]
        %v788 = vld [vmem:[#allocation5 + $0x1f8] sm:$0xff]
        %v789 = vld [vmem:[#allocation5 + $0x503] sm:$0x1]
        %v790 = vlaneseq
        %v791 = vshrl.u32 %v790, 7
        %v792 = vsub.s32 0, %v791
        %v793 = vrot.slane %v789, %v792
        %794 = vmatprep.subr.mxu0 0.0
        %795 = vmatpush1.msra.mxu0 %v773
        %796 = vmatprep.subr.mxu0 0.0
        %797 = vmatpush1.msra.mxu0 %v774
        %798 = vmatprep.subr.mxu0 0.0
        %799 = vmatpush1.msra.mxu0 %v775
        %800 = vmatprep.subr.mxu0 0.0
        %801 = vmatpush1.msra.mxu0 %v776
        %802 = vmatprep.subr.mxu0 0.0
        %803 = vmatpush1.msra.mxu0 %v777
        %804 = vmatprep.subr.mxu0 0.0
        %805 = vmatpush1.msra.mxu0 %v778
        %806 = vmatprep.subr.mxu0 0.0
        %807 = vmatpush1.msra.mxu0 %v779
        %808 = vmatprep.subr.mxu0 0.0
        %809 = vmatpush1.msra.mxu0 %v780
        %810 = vmatprep.subr.mxu0 0.0
        %811 = vmatpush1.msra.mxu0 %v781
        %812 = vmatprep.subr.mxu0 0.0
        %813 = vmatpush1.msra.mxu0 %v782
        %814 = vmatprep.subr.mxu0 0.0
        %815 = vmatpush1.msra.mxu0 %v783
        %816 = vmatprep.subr.mxu0 0.0
        %817 = vmatpush1.msra.mxu0 %v784
        %818 = vmatprep.subr.mxu0 0.0
        %819 = vmatpush1.msra.mxu0 %v785
        %820 = vmatprep.subr.mxu0 0.0
        %821 = vmatpush1.msra.mxu0 %v786
        %822 = vmatprep.subr.mxu0 0.0
        %823 = vmatpush1.msra.mxu0 %v787
        %824 = vmatprep.subr.mxu0 0.0
        %825 = vmatpush1.msra.mxu0 %v788
        %826 = vmatprep.subr.mxu0 0.0
        %827 = vmatpush1.msra.mxu0 0.0
        %828 = vmatprep.subr.mxu0 0.0
        %829 = vmatpush1.msra.mxu0 0.0
        %830 = vmatprep.subr.mxu0 0.0
        %831 = vmatpush1.msra.mxu0 0.0
        %832 = vmatprep.subr.mxu0 0.0
        %833 = vmatpush1.msra.mxu0 0.0
        %834 = vmatprep.subr.mxu0 0.0
        %835 = vmatpush1.msra.mxu0 0.0
        %836 = vmatprep.subr.mxu0 0.0
        %837 = vmatpush1.msra.mxu0 0.0
        %838 = vmatprep.subr.mxu0 0.0
        %839 = vmatpush1.msra.mxu0 0.0
        %840 = vmatprep.subr.mxu0 0.0
        %841 = vmatpush1.msra.mxu0 0.0
        %842 = vmatprep.subr.mxu0 0.0
        %843 = vmatpush1.msra.mxu0 0.0
        %844 = vmatprep.subr.mxu0 0.0
        %845 = vmatpush1.msra.mxu0 0.0
        %846 = vmatprep.subr.mxu0 0.0
        %847 = vmatpush1.msra.mxu0 0.0
        %848 = vmatprep.subr.mxu0 0.0
        %849 = vmatpush1.msra.mxu0 0.0
        %850 = vmatprep.subr.mxu0 0.0
        %851 = vmatpush1.msra.mxu0 0.0
        %852 = vmatprep.subr.mxu0 0.0
        %853 = vmatpush1.msra.mxu0 0.0
        %854 = vmatprep.subr.mxu0 0.0
        %855 = vmatpush1.msra.mxu0 0.0
        %856 = vmatprep.subr.mxu0 0.0
        %857 = vmatpush1.msra.mxu0 0.0
        %858 = vmatprep.mubr.f32.mxu0 0.0
        %859 = vmatmul.mubr.f32.gmra.mrb[0].mxu0 %v575
        %v860 = vpop.f32.mrb[0].mxu0
        %v861 = vadd.f32 %v793, %v860
        %v862 = vpop.f32.mrb[0].mxu0
        %863 = vmatprep.mubr.f32.mxu0 0.0
        %864 = vmatmul.mubr.f32.gmra.mrb[0].mxu0 %v576
        %v865 = vpop.f32.mrb[0].mxu0
        %v866 = vadd.f32 %v793, %v865
        %v867 = vpop.f32.mrb[0].mxu0
        %868 = vmatprep.mubr.f32.mxu0 0.0
        %869 = vmatmul.mubr.f32.gmra.mrb[0].mxu0 %v577
        %v870 = vpop.f32.mrb[0].mxu0
        %v871 = vadd.f32 %v793, %v870
        %v872 = vpop.f32.mrb[0].mxu0
        %873 = vmatprep.mubr.f32.mxu0 0.0
        %874 = vmatmul.mubr.f32.gmra.mrb[0].mxu0 %v578
        %v875 = vpop.f32.mrb[0].mxu0
        %v876 = vadd.f32 %v793, %v875
        %v877 = vpop.f32.mrb[0].mxu0
        %878 = vmatprep.mubr.f32.mxu0 0.0
        %879 = vmatmul.mubr.f32.gmra.mrb[0].mxu0 %v579
        %v880 = vpop.f32.mrb[0].mxu0
        %v881 = vadd.f32 %v793, %v880
        %v882 = vpop.f32.mrb[0].mxu0
        %883 = vmatprep.mubr.f32.mxu0 0.0
        %884 = vmatmul.mubr.f32.gmra.mrb[0].mxu0 %v580
        %v885 = vpop.f32.mrb[0].mxu0
        %v886 = vadd.f32 %v793, %v885
        %v887 = vpop.f32.mrb[0].mxu0
        %888 = vmatprep.mubr.f32.mxu0 0.0
        %889 = vmatmul.mubr.f32.gmra.mrb[0].mxu0 %v581
        %v890 = vpop.f32.mrb[0].mxu0
        %v891 = vadd.f32 %v793, %v890
        %v892 = vpop.f32.mrb[0].mxu0
        %893 = vmatprep.mubr.f32.mxu0 0.0
        %894 = vmatmul.mubr.f32.gmra.mrb[0].mxu0 %v582
        %v895 = vpop.f32.mrb[0].mxu0
        %v896 = vadd.f32 %v793, %v895
        %v897 = vpop.f32.mrb[0].mxu0
        %898 = vmatprep.mubr.f32.mxu0 0.0
        %899 = vmatmul.mubr.f32.gmra.mrb[0].mxu0 %v583
        %v900 = vpop.f32.mrb[0].mxu0
        %v901 = vadd.f32 %v793, %v900
        %v902 = vpop.f32.mrb[0].mxu0
        %903 = vmatprep.mubr.f32.mxu0 0.0
        %904 = vmatmul.mubr.f32.gmra.mrb[0].mxu0 %v584
        %v905 = vpop.f32.mrb[0].mxu0
        %v906 = vadd.f32 %v793, %v905
        %v907 = vpop.f32.mrb[0].mxu0
        %908 = vmatprep.mubr.f32.mxu0 0.0
        %909 = vmatmul.mubr.f32.gmra.mrb[0].mxu0 %v585
        %v910 = vpop.f32.mrb[0].mxu0
        %v911 = vadd.f32 %v793, %v910
        %v912 = vpop.f32.mrb[0].mxu0
        %913 = vmatprep.mubr.f32.mxu0 0.0
        %914 = vmatmul.mubr.f32.gmra.mrb[0].mxu0 %v586
        %v915 = vpop.f32.mrb[0].mxu0
        %v916 = vadd.f32 %v793, %v915
        %v917 = vpop.f32.mrb[0].mxu0
        %918 = vmatprep.mubr.f32.mxu0 0.0
        %919 = vmatmul.mubr.f32.gmra.mrb[0].mxu0 %v587
        %v920 = vpop.f32.mrb[0].mxu0
        %v921 = vadd.f32 %v793, %v920
        %v922 = vpop.f32.mrb[0].mxu0
        %923 = vmatprep.mubr.f32.mxu0 0.0
        %924 = vmatmul.mubr.f32.gmra.mrb[0].mxu0 %v588
        %v925 = vpop.f32.mrb[0].mxu0
        %v926 = vadd.f32 %v793, %v925
        %v927 = vpop.f32.mrb[0].mxu0
        %928 = vmatprep.mubr.f32.mxu0 0.0
        %929 = vmatmul.mubr.f32.gmra.mrb[0].mxu0 %v589
        %v930 = vpop.f32.mrb[0].mxu0
        %v931 = vadd.f32 %v793, %v930
        %v932 = vpop.f32.mrb[0].mxu0
        %933 = vmatprep.mubr.f32.mxu0 0.0
        %934 = vmatmul.mubr.f32.gmra.mrb[0].mxu0 %v590
        %v935 = vpop.f32.mrb[0].mxu0
        %v936 = vadd.f32 %v793, %v935
        %v937 = vpop.f32.mrb[0].mxu0
        %938 = vdwg.mxu0
        %v939 = vmax.f32 %v861, 0.0
        %v940 = vmax.f32 %v866, 0.0
        %v941 = vmax.f32 %v871, 0.0
        %v942 = vmax.f32 %v876, 0.0
        %v943 = vmax.f32 %v881, 0.0
        %v944 = vmax.f32 %v886, 0.0
        %v945 = vmax.f32 %v891, 0.0
        %v946 = vmax.f32 %v896, 0.0
        %v947 = vmax.f32 %v901, 0.0
        %v948 = vmax.f32 %v906, 0.0
        %v949 = vmax.f32 %v911, 0.0
        %v950 = vmax.f32 %v916, 0.0
        %v951 = vmax.f32 %v921, 0.0
        %v952 = vmax.f32 %v926, 0.0
        %v953 = vmax.f32 %v931, 0.0
        %v954 = vmax.f32 %v936, 0.0
        %v955 = vadd.f32 %v575, %v757
        %v956 = vadd.f32 %v576, %v758
        %v957 = vadd.f32 %v577, %v759
        %v958 = vadd.f32 %v578, %v760
        %v959 = vadd.f32 %v579, %v761
        %v960 = vadd.f32 %v580, %v762
        %v961 = vadd.f32 %v581, %v763
        %v962 = vadd.f32 %v582, %v764
        %v963 = vadd.f32 %v583, %v765
        %v964 = vadd.f32 %v584, %v766
        %v965 = vadd.f32 %v585, %v767
        %v966 = vadd.f32 %v586, %v768
        %v967 = vadd.f32 %v587, %v769
        %v968 = vadd.f32 %v588, %v770
        %v969 = vadd.f32 %v589, %v771
        %v970 = vadd.f32 %v590, %v772
        %v971 = vld [vmem:[#allocation5 + $0x200] sm:$0xff]
        %v972 = vld [vmem:[#allocation5 + $0x208] sm:$0xff]
        %v973 = vld [vmem:[#allocation5 + $0x210] sm:$0xff]
        %v974 = vld [vmem:[#allocation5 + $0x218] sm:$0xff]
        %v975 = vld [vmem:[#allocation5 + $0x220] sm:$0xff]
        %v976 = vld [vmem:[#allocation5 + $0x228] sm:$0xff]
        %v977 = vld [vmem:[#allocation5 + $0x230] sm:$0xff]
        %v978 = vld [vmem:[#allocation5 + $0x238] sm:$0xff]
        %v979 = vld [vmem:[#allocation5 + $0x240] sm:$0xff]
        %v980 = vld [vmem:[#allocation5 + $0x248] sm:$0xff]
        %v981 = vld [vmem:[#allocation5 + $0x250] sm:$0xff]
        %v982 = vld [vmem:[#allocation5 + $0x258] sm:$0xff]
        %v983 = vld [vmem:[#allocation5 + $0x260] sm:$0xff]
        %v984 = vld [vmem:[#allocation5 + $0x268] sm:$0xff]
        %v985 = vld [vmem:[#allocation5 + $0x270] sm:$0xff]
        %v986 = vld [vmem:[#allocation5 + $0x278] sm:$0xff]
        %v987 = vld [vmem:[#allocation5 + $0x280] sm:$0xff]
        %v988 = vld [vmem:[#allocation5 + $0x288] sm:$0xff]
        %v989 = vld [vmem:[#allocation5 + $0x290] sm:$0xff]
        %v990 = vld [vmem:[#allocation5 + $0x298] sm:$0xff]
        %v991 = vld [vmem:[#allocation5 + $0x2a0] sm:$0xff]
        %v992 = vld [vmem:[#allocation5 + $0x2a8] sm:$0xff]
        %v993 = vld [vmem:[#allocation5 + $0x2b0] sm:$0xff]
        %v994 = vld [vmem:[#allocation5 + $0x2b8] sm:$0xff]
        %v995 = vld [vmem:[#allocation5 + $0x2c0] sm:$0xff]
        %v996 = vld [vmem:[#allocation5 + $0x2c8] sm:$0xff]
        %v997 = vld [vmem:[#allocation5 + $0x2d0] sm:$0xff]
        %v998 = vld [vmem:[#allocation5 + $0x2d8] sm:$0xff]
        %v999 = vld [vmem:[#allocation5 + $0x2e0] sm:$0xff]
        %v1000 = vld [vmem:[#allocation5 + $0x2e8] sm:$0xff]
        %v1001 = vld [vmem:[#allocation5 + $0x2f0] sm:$0xff]
        %v1002 = vld [vmem:[#allocation5 + $0x2f8] sm:$0xff]
        %1003 = vmatprep.subr.mxu0 0.0
        %1004 = vmatpush1.msra.mxu0 %v987
        %1005 = vmatprep.subr.mxu0 0.0
        %1006 = vmatpush1.msra.mxu0 %v988
        %1007 = vmatprep.subr.mxu0 0.0
        %1008 = vmatpush1.msra.mxu0 %v989
        %1009 = vmatprep.subr.mxu0 0.0
        %1010 = vmatpush1.msra.mxu0 %v990
        %1011 = vmatprep.subr.mxu0 0.0
        %1012 = vmatpush1.msra.mxu0 %v991
        %1013 = vmatprep.subr.mxu0 0.0
        %1014 = vmatpush1.msra.mxu0 %v992
        %1015 = vmatprep.subr.mxu0 0.0
        %1016 = vmatpush1.msra.mxu0 %v993
        %1017 = vmatprep.subr.mxu0 0.0
        %1018 = vmatpush1.msra.mxu0 %v994
        %1019 = vmatprep.subr.mxu0 0.0
        %1020 = vmatpush1.msra.mxu0 %v995
        %1021 = vmatprep.subr.mxu0 0.0
        %1022 = vmatpush1.msra.mxu0 %v996
        %1023 = vmatprep.subr.mxu0 0.0
        %1024 = vmatpush1.msra.mxu0 %v997
        %1025 = vmatprep.subr.mxu0 0.0
        %1026 = vmatpush1.msra.mxu0 %v998
        %1027 = vmatprep.subr.mxu0 0.0
        %1028 = vmatpush1.msra.mxu0 %v999
        %1029 = vmatprep.subr.mxu0 0.0
        %1030 = vmatpush1.msra.mxu0 %v1000
        %1031 = vmatprep.subr.mxu0 0.0
        %1032 = vmatpush1.msra.mxu0 %v1001
        %1033 = vmatprep.subr.mxu0 0.0
        %1034 = vmatpush1.msra.mxu0 %v1002
        %1035 = vmatprep.subr.mxu0 0.0
        %1036 = vmatpush1.msra.mxu0 0.0
        %1037 = vmatprep.subr.mxu0 0.0
        %1038 = vmatpush1.msra.mxu0 0.0
        %1039 = vmatprep.subr.mxu0 0.0
        %1040 = vmatpush1.msra.mxu0 0.0
        %1041 = vmatprep.subr.mxu0 0.0
        %1042 = vmatpush1.msra.mxu0 0.0
        %1043 = vmatprep.subr.mxu0 0.0
        %1044 = vmatpush1.msra.mxu0 0.0
        %1045 = vmatprep.subr.mxu0 0.0
        %1046 = vmatpush1.msra.mxu0 0.0
        %1047 = vmatprep.subr.mxu0 0.0
        %1048 = vmatpush1.msra.mxu0 0.0
        %1049 = vmatprep.subr.mxu0 0.0
        %1050 = vmatpush1.msra.mxu0 0.0
        %1051 = vmatprep.subr.mxu0 0.0
        %1052 = vmatpush1.msra.mxu0 0.0
        %1053 = vmatprep.subr.mxu0 0.0
        %1054 = vmatpush1.msra.mxu0 0.0
        %1055 = vmatprep.subr.mxu0 0.0
        %1056 = vmatpush1.msra.mxu0 0.0
        %1057 = vmatprep.subr.mxu0 0.0
        %1058 = vmatpush1.msra.mxu0 0.0
        %1059 = vmatprep.subr.mxu0 0.0
        %1060 = vmatpush1.msra.mxu0 0.0
        %1061 = vmatprep.subr.mxu0 0.0
        %1062 = vmatpush1.msra.mxu0 0.0
        %1063 = vmatprep.subr.mxu0 0.0
        %1064 = vmatpush1.msra.mxu0 0.0
        %1065 = vmatprep.subr.mxu0 0.0
        %1066 = vmatpush1.msra.mxu0 0.0
        %1067 = vmatprep.mubr.f32.mxu0 0.0
        %1068 = vmatmul.mubr.f32.gmra.mrb[0].mxu0 %v939
        %v1069 = vpop.f32.mrb[0].mxu0
        %v1070 = vadd.f32 0.0, %v1069
        %v1071 = vpop.f32.mrb[0].mxu0
        %1072 = vmatprep.mubr.f32.mxu0 0.0
        %1073 = vmatmul.mubr.f32.gmra.mrb[0].mxu0 %v940
        %v1074 = vpop.f32.mrb[0].mxu0
        %v1075 = vadd.f32 0.0, %v1074
        %v1076 = vpop.f32.mrb[0].mxu0
        %1077 = vmatprep.mubr.f32.mxu0 0.0
        %1078 = vmatmul.mubr.f32.gmra.mrb[0].mxu0 %v941
        %v1079 = vpop.f32.mrb[0].mxu0
        %v1080 = vadd.f32 0.0, %v1079
        %v1081 = vpop.f32.mrb[0].mxu0
        %1082 = vmatprep.mubr.f32.mxu0 0.0
        %1083 = vmatmul.mubr.f32.gmra.mrb[0].mxu0 %v942
        %v1084 = vpop.f32.mrb[0].mxu0
        %v1085 = vadd.f32 0.0, %v1084
        %v1086 = vpop.f32.mrb[0].mxu0
        %1087 = vmatprep.mubr.f32.mxu0 0.0
        %1088 = vmatmul.mubr.f32.gmra.mrb[0].mxu0 %v943
        %v1089 = vpop.f32.mrb[0].mxu0
        %v1090 = vadd.f32 0.0, %v1089
        %v1091 = vpop.f32.mrb[0].mxu0
        %1092 = vmatprep.mubr.f32.mxu0 0.0
        %1093 = vmatmul.mubr.f32.gmra.mrb[0].mxu0 %v944
        %v1094 = vpop.f32.mrb[0].mxu0
        %v1095 = vadd.f32 0.0, %v1094
        %v1096 = vpop.f32.mrb[0].mxu0
        %1097 = vmatprep.mubr.f32.mxu0 0.0
        %1098 = vmatmul.mubr.f32.gmra.mrb[0].mxu0 %v945
        %v1099 = vpop.f32.mrb[0].mxu0
        %v1100 = vadd.f32 0.0, %v1099
        %v1101 = vpop.f32.mrb[0].mxu0
        %1102 = vmatprep.mubr.f32.mxu0 0.0
        %1103 = vmatmul.mubr.f32.gmra.mrb[0].mxu0 %v946
        %v1104 = vpop.f32.mrb[0].mxu0
        %v1105 = vadd.f32 0.0, %v1104
        %v1106 = vpop.f32.mrb[0].mxu0
        %1107 = vmatprep.mubr.f32.mxu0 0.0
        %1108 = vmatmul.mubr.f32.gmra.mrb[0].mxu0 %v947
        %v1109 = vpop.f32.mrb[0].mxu0
        %v1110 = vadd.f32 0.0, %v1109
        %v1111 = vpop.f32.mrb[0].mxu0
        %1112 = vmatprep.mubr.f32.mxu0 0.0
        %1113 = vmatmul.mubr.f32.gmra.mrb[0].mxu0 %v948
        %v1114 = vpop.f32.mrb[0].mxu0
        %v1115 = vadd.f32 0.0, %v1114
        %v1116 = vpop.f32.mrb[0].mxu0
        %1117 = vmatprep.mubr.f32.mxu0 0.0
        %1118 = vmatmul.mubr.f32.gmra.mrb[0].mxu0 %v949
        %v1119 = vpop.f32.mrb[0].mxu0
        %v1120 = vadd.f32 0.0, %v1119
        %v1121 = vpop.f32.mrb[0].mxu0
        %1122 = vmatprep.mubr.f32.mxu0 0.0
        %1123 = vmatmul.mubr.f32.gmra.mrb[0].mxu0 %v950
        %v1124 = vpop.f32.mrb[0].mxu0
        %v1125 = vadd.f32 0.0, %v1124
        %v1126 = vpop.f32.mrb[0].mxu0
        %1127 = vmatprep.mubr.f32.mxu0 0.0
        %1128 = vmatmul.mubr.f32.gmra.mrb[0].mxu0 %v951
        %v1129 = vpop.f32.mrb[0].mxu0
        %v1130 = vadd.f32 0.0, %v1129
        %v1131 = vpop.f32.mrb[0].mxu0
        %1132 = vmatprep.mubr.f32.mxu0 0.0
        %1133 = vmatmul.mubr.f32.gmra.mrb[0].mxu0 %v952
        %v1134 = vpop.f32.mrb[0].mxu0
        %v1135 = vadd.f32 0.0, %v1134
        %v1136 = vpop.f32.mrb[0].mxu0
        %1137 = vmatprep.mubr.f32.mxu0 0.0
        %1138 = vmatmul.mubr.f32.gmra.mrb[0].mxu0 %v953
        %v1139 = vpop.f32.mrb[0].mxu0
        %v1140 = vadd.f32 0.0, %v1139
        %v1141 = vpop.f32.mrb[0].mxu0
        %1142 = vmatprep.mubr.f32.mxu0 0.0
        %1143 = vmatmul.mubr.f32.gmra.mrb[0].mxu0 %v954
        %v1144 = vpop.f32.mrb[0].mxu0
        %v1145 = vadd.f32 0.0, %v1144
        %v1146 = vpop.f32.mrb[0].mxu0
        %1147 = vdwg.mxu0
        %1148 = vmatprep.subr.mxu0 0.0
        %1149 = vmatpush1.msra.mxu0 %v971
        %1150 = vmatprep.subr.mxu0 0.0
        %1151 = vmatpush1.msra.mxu0 %v972
        %1152 = vmatprep.subr.mxu0 0.0
        %1153 = vmatpush1.msra.mxu0 %v973
        %1154 = vmatprep.subr.mxu0 0.0
        %1155 = vmatpush1.msra.mxu0 %v974
        %1156 = vmatprep.subr.mxu0 0.0
        %1157 = vmatpush1.msra.mxu0 %v975
        %1158 = vmatprep.subr.mxu0 0.0
        %1159 = vmatpush1.msra.mxu0 %v976
        %1160 = vmatprep.subr.mxu0 0.0
        %1161 = vmatpush1.msra.mxu0 %v977
        %1162 = vmatprep.subr.mxu0 0.0
        %1163 = vmatpush1.msra.mxu0 %v978
        %1164 = vmatprep.subr.mxu0 0.0
        %1165 = vmatpush1.msra.mxu0 %v979
        %1166 = vmatprep.subr.mxu0 0.0
        %1167 = vmatpush1.msra.mxu0 %v980
        %1168 = vmatprep.subr.mxu0 0.0
        %1169 = vmatpush1.msra.mxu0 %v981
        %1170 = vmatprep.subr.mxu0 0.0
        %1171 = vmatpush1.msra.mxu0 %v982
        %1172 = vmatprep.subr.mxu0 0.0
        %1173 = vmatpush1.msra.mxu0 %v983
        %1174 = vmatprep.subr.mxu0 0.0
        %1175 = vmatpush1.msra.mxu0 %v984
        %1176 = vmatprep.subr.mxu0 0.0
        %1177 = vmatpush1.msra.mxu0 %v985
        %1178 = vmatprep.subr.mxu0 0.0
        %1179 = vmatpush1.msra.mxu0 %v986
        %1180 = vmatprep.subr.mxu0 0.0
        %1181 = vmatpush1.msra.mxu0 0.0
        %1182 = vmatprep.subr.mxu0 0.0
        %1183 = vmatpush1.msra.mxu0 0.0
        %1184 = vmatprep.subr.mxu0 0.0
        %1185 = vmatpush1.msra.mxu0 0.0
        %1186 = vmatprep.subr.mxu0 0.0
        %1187 = vmatpush1.msra.mxu0 0.0
        %1188 = vmatprep.subr.mxu0 0.0
        %1189 = vmatpush1.msra.mxu0 0.0
        %1190 = vmatprep.subr.mxu0 0.0
        %1191 = vmatpush1.msra.mxu0 0.0
        %1192 = vmatprep.subr.mxu0 0.0
        %1193 = vmatpush1.msra.mxu0 0.0
        %1194 = vmatprep.subr.mxu0 0.0
        %1195 = vmatpush1.msra.mxu0 0.0
        %1196 = vmatprep.subr.mxu0 0.0
        %1197 = vmatpush1.msra.mxu0 0.0
        %1198 = vmatprep.subr.mxu0 0.0
        %1199 = vmatpush1.msra.mxu0 0.0
        %1200 = vmatprep.subr.mxu0 0.0
        %1201 = vmatpush1.msra.mxu0 0.0
        %1202 = vmatprep.subr.mxu0 0.0
        %1203 = vmatpush1.msra.mxu0 0.0
        %1204 = vmatprep.subr.mxu0 0.0
        %1205 = vmatpush1.msra.mxu0 0.0
        %1206 = vmatprep.subr.mxu0 0.0
        %1207 = vmatpush1.msra.mxu0 0.0
        %1208 = vmatprep.subr.mxu0 0.0
        %1209 = vmatpush1.msra.mxu0 0.0
        %1210 = vmatprep.subr.mxu0 0.0
        %1211 = vmatpush1.msra.mxu0 0.0
        %1212 = vmatprep.mubr.f32.mxu0 0.0
        %1213 = vmatmul.mubr.f32.gmra.mrb[0].mxu0 %v955
        %v1214 = vpop.f32.mrb[0].mxu0
        %v1215 = vadd.f32 %v1070, %v1214
        %v1216 = vpop.f32.mrb[0].mxu0
        %1217 = vmatprep.mubr.f32.mxu0 0.0
        %1218 = vmatmul.mubr.f32.gmra.mrb[0].mxu0 %v956
        %v1219 = vpop.f32.mrb[0].mxu0
        %v1220 = vadd.f32 %v1075, %v1219
        %v1221 = vpop.f32.mrb[0].mxu0
        %1222 = vmatprep.mubr.f32.mxu0 0.0
        %1223 = vmatmul.mubr.f32.gmra.mrb[0].mxu0 %v957
        %v1224 = vpop.f32.mrb[0].mxu0
        %v1225 = vadd.f32 %v1080, %v1224
        %v1226 = vpop.f32.mrb[0].mxu0
        %1227 = vmatprep.mubr.f32.mxu0 0.0
        %1228 = vmatmul.mubr.f32.gmra.mrb[0].mxu0 %v958
        %v1229 = vpop.f32.mrb[0].mxu0
        %v1230 = vadd.f32 %v1085, %v1229
        %v1231 = vpop.f32.mrb[0].mxu0
        %1232 = vmatprep.mubr.f32.mxu0 0.0
        %1233 = vmatmul.mubr.f32.gmra.mrb[0].mxu0 %v959
        %v1234 = vpop.f32.mrb[0].mxu0
        %v1235 = vadd.f32 %v1090, %v1234
        %v1236 = vpop.f32.mrb[0].mxu0
        %1237 = vmatprep.mubr.f32.mxu0 0.0
        %1238 = vmatmul.mubr.f32.gmra.mrb[0].mxu0 %v960
        %v1239 = vpop.f32.mrb[0].mxu0
        %v1240 = vadd.f32 %v1095, %v1239
        %v1241 = vpop.f32.mrb[0].mxu0
        %1242 = vmatprep.mubr.f32.mxu0 0.0
        %1243 = vmatmul.mubr.f32.gmra.mrb[0].mxu0 %v961
        %v1244 = vpop.f32.mrb[0].mxu0
        %v1245 = vadd.f32 %v1100, %v1244
        %v1246 = vpop.f32.mrb[0].mxu0
        %1247 = vmatprep.mubr.f32.mxu0 0.0
        %1248 = vmatmul.mubr.f32.gmra.mrb[0].mxu0 %v962
        %v1249 = vpop.f32.mrb[0].mxu0
        %v1250 = vadd.f32 %v1105, %v1249
        %v1251 = vpop.f32.mrb[0].mxu0
        %1252 = vmatprep.mubr.f32.mxu0 0.0
        %1253 = vmatmul.mubr.f32.gmra.mrb[0].mxu0 %v963
        %v1254 = vpop.f32.mrb[0].mxu0
        %v1255 = vadd.f32 %v1110, %v1254
        %v1256 = vpop.f32.mrb[0].mxu0
        %1257 = vmatprep.mubr.f32.mxu0 0.0
        %1258 = vmatmul.mubr.f32.gmra.mrb[0].mxu0 %v964
        %v1259 = vpop.f32.mrb[0].mxu0
        %v1260 = vadd.f32 %v1115, %v1259
        %v1261 = vpop.f32.mrb[0].mxu0
        %1262 = vmatprep.mubr.f32.mxu0 0.0
        %1263 = vmatmul.mubr.f32.gmra.mrb[0].mxu0 %v965
        %v1264 = vpop.f32.mrb[0].mxu0
        %v1265 = vadd.f32 %v1120, %v1264
        %v1266 = vpop.f32.mrb[0].mxu0
        %1267 = vmatprep.mubr.f32.mxu0 0.0
        %1268 = vmatmul.mubr.f32.gmra.mrb[0].mxu0 %v966
        %v1269 = vpop.f32.mrb[0].mxu0
        %v1270 = vadd.f32 %v1125, %v1269
        %v1271 = vpop.f32.mrb[0].mxu0
        %1272 = vmatprep.mubr.f32.mxu0 0.0
        %1273 = vmatmul.mubr.f32.gmra.mrb[0].mxu0 %v967
        %v1274 = vpop.f32.mrb[0].mxu0
        %v1275 = vadd.f32 %v1130, %v1274
        %v1276 = vpop.f32.mrb[0].mxu0
        %1277 = vmatprep.mubr.f32.mxu0 0.0
        %1278 = vmatmul.mubr.f32.gmra.mrb[0].mxu0 %v968
        %v1279 = vpop.f32.mrb[0].mxu0
        %v1280 = vadd.f32 %v1135, %v1279
        %v1281 = vpop.f32.mrb[0].mxu0
        %1282 = vmatprep.mubr.f32.mxu0 0.0
        %1283 = vmatmul.mubr.f32.gmra.mrb[0].mxu0 %v969
        %v1284 = vpop.f32.mrb[0].mxu0
        %v1285 = vadd.f32 %v1140, %v1284
        %v1286 = vpop.f32.mrb[0].mxu0
        %1287 = vmatprep.mubr.f32.mxu0 0.0
        %1288 = vmatmul.mubr.f32.gmra.mrb[0].mxu0 %v970
        %v1289 = vpop.f32.mrb[0].mxu0
        %v1290 = vadd.f32 %v1145, %v1289
        %v1291 = vpop.f32.mrb[0].mxu0
        %1292 = vdwg.mxu0
        %v1293 = vld [vmem:[#allocation5 + $0x504] sm:$0x1]
        %v1294 = vlaneseq
        %v1295 = vshrl.u32 %v1294, 7
        %v1296 = vsub.s32 0, %v1295
        %v1297 = vrot.slane %v1293, %v1296
        %v1298 = vadd.f32 %v1215, %v1297
        %v1299 = vadd.f32 %v1220, %v1297
        %v1300 = vadd.f32 %v1225, %v1297
        %v1301 = vadd.f32 %v1230, %v1297
        %v1302 = vadd.f32 %v1235, %v1297
        %v1303 = vadd.f32 %v1240, %v1297
        %v1304 = vadd.f32 %v1245, %v1297
        %v1305 = vadd.f32 %v1250, %v1297
        %v1306 = vadd.f32 %v1255, %v1297
        %v1307 = vadd.f32 %v1260, %v1297
        %v1308 = vadd.f32 %v1265, %v1297
        %v1309 = vadd.f32 %v1270, %v1297
        %v1310 = vadd.f32 %v1275, %v1297
        %v1311 = vadd.f32 %v1280, %v1297
        %v1312 = vadd.f32 %v1285, %v1297
        %v1313 = vadd.f32 %v1290, %v1297
        %v1314 = vmax.f32 %v1298, 0.0
        %v1315 = vmax.f32 %v1299, 0.0
        %v1316 = vmax.f32 %v1300, 0.0
        %v1317 = vmax.f32 %v1301, 0.0
        %v1318 = vmax.f32 %v1302, 0.0
        %v1319 = vmax.f32 %v1303, 0.0
        %v1320 = vmax.f32 %v1304, 0.0
        %v1321 = vmax.f32 %v1305, 0.0
        %v1322 = vmax.f32 %v1306, 0.0
        %v1323 = vmax.f32 %v1307, 0.0
        %v1324 = vmax.f32 %v1308, 0.0
        %v1325 = vmax.f32 %v1309, 0.0
        %v1326 = vmax.f32 %v1310, 0.0
        %v1327 = vmax.f32 %v1311, 0.0
        %v1328 = vmax.f32 %v1312, 0.0
        %v1329 = vmax.f32 %v1313, 0.0
        %v1330 = vadd.f32 %v939, %v1314
        %v1331 = vadd.f32 %v940, %v1315
        %v1332 = vadd.f32 %v941, %v1316
        %v1333 = vadd.f32 %v942, %v1317
        %v1334 = vadd.f32 %v943, %v1318
        %v1335 = vadd.f32 %v944, %v1319
        %v1336 = vadd.f32 %v945, %v1320
        %v1337 = vadd.f32 %v946, %v1321
        %v1338 = vadd.f32 %v947, %v1322
        %v1339 = vadd.f32 %v948, %v1323
        %v1340 = vadd.f32 %v949, %v1324
        %v1341 = vadd.f32 %v950, %v1325
        %v1342 = vadd.f32 %v951, %v1326
        %v1343 = vadd.f32 %v952, %v1327
        %v1344 = vadd.f32 %v953, %v1328
        %v1345 = vadd.f32 %v954, %v1329
        %v1346 = vld [vmem:[#allocation5 + $0x300] sm:$0xff]
        %v1347 = vld [vmem:[#allocation5 + $0x308] sm:$0xff]
        %v1348 = vld [vmem:[#allocation5 + $0x310] sm:$0xff]
        %v1349 = vld [vmem:[#allocation5 + $0x318] sm:$0xff]
        %v1350 = vld [vmem:[#allocation5 + $0x320] sm:$0xff]
        %v1351 = vld [vmem:[#allocation5 + $0x328] sm:$0xff]
        %v1352 = vld [vmem:[#allocation5 + $0x330] sm:$0xff]
        %v1353 = vld [vmem:[#allocation5 + $0x338] sm:$0xff]
        %v1354 = vld [vmem:[#allocation5 + $0x340] sm:$0xff]
        %v1355 = vld [vmem:[#allocation5 + $0x348] sm:$0xff]
        %v1356 = vld [vmem:[#allocation5 + $0x350] sm:$0xff]
        %v1357 = vld [vmem:[#allocation5 + $0x358] sm:$0xff]
        %v1358 = vld [vmem:[#allocation5 + $0x360] sm:$0xff]
        %v1359 = vld [vmem:[#allocation5 + $0x368] sm:$0xff]
        %v1360 = vld [vmem:[#allocation5 + $0x370] sm:$0xff]
        %v1361 = vld [vmem:[#allocation5 + $0x378] sm:$0xff]
        %v1362 = vld [vmem:[#allocation5 + $0x380] sm:$0xff]
        %v1363 = vld [vmem:[#allocation5 + $0x388] sm:$0xff]
        %v1364 = vld [vmem:[#allocation5 + $0x390] sm:$0xff]
        %v1365 = vld [vmem:[#allocation5 + $0x398] sm:$0xff]
        %v1366 = vld [vmem:[#allocation5 + $0x3a0] sm:$0xff]
        %v1367 = vld [vmem:[#allocation5 + $0x3a8] sm:$0xff]
        %v1368 = vld [vmem:[#allocation5 + $0x3b0] sm:$0xff]
        %v1369 = vld [vmem:[#allocation5 + $0x3b8] sm:$0xff]
        %v1370 = vld [vmem:[#allocation5 + $0x3c0] sm:$0xff]
        %v1371 = vld [vmem:[#allocation5 + $0x3c8] sm:$0xff]
        %v1372 = vld [vmem:[#allocation5 + $0x3d0] sm:$0xff]
        %v1373 = vld [vmem:[#allocation5 + $0x3d8] sm:$0xff]
        %v1374 = vld [vmem:[#allocation5 + $0x3e0] sm:$0xff]
        %v1375 = vld [vmem:[#allocation5 + $0x3e8] sm:$0xff]
        %v1376 = vld [vmem:[#allocation5 + $0x3f0] sm:$0xff]
        %v1377 = vld [vmem:[#allocation5 + $0x3f8] sm:$0xff]
        %1378 = vmatprep.subr.mxu0 0.0
        %1379 = vmatpush1.msra.mxu0 %v1362
        %1380 = vmatprep.subr.mxu0 0.0
        %1381 = vmatpush1.msra.mxu0 %v1363
        %1382 = vmatprep.subr.mxu0 0.0
        %1383 = vmatpush1.msra.mxu0 %v1364
        %1384 = vmatprep.subr.mxu0 0.0
        %1385 = vmatpush1.msra.mxu0 %v1365
        %1386 = vmatprep.subr.mxu0 0.0
        %1387 = vmatpush1.msra.mxu0 %v1366
        %1388 = vmatprep.subr.mxu0 0.0
        %1389 = vmatpush1.msra.mxu0 %v1367
        %1390 = vmatprep.subr.mxu0 0.0
        %1391 = vmatpush1.msra.mxu0 %v1368
        %1392 = vmatprep.subr.mxu0 0.0
        %1393 = vmatpush1.msra.mxu0 %v1369
        %1394 = vmatprep.subr.mxu0 0.0
        %1395 = vmatpush1.msra.mxu0 %v1370
        %1396 = vmatprep.subr.mxu0 0.0
        %1397 = vmatpush1.msra.mxu0 %v1371
        %1398 = vmatprep.subr.mxu0 0.0
        %1399 = vmatpush1.msra.mxu0 %v1372
        %1400 = vmatprep.subr.mxu0 0.0
        %1401 = vmatpush1.msra.mxu0 %v1373
        %1402 = vmatprep.subr.mxu0 0.0
        %1403 = vmatpush1.msra.mxu0 %v1374
        %1404 = vmatprep.subr.mxu0 0.0
        %1405 = vmatpush1.msra.mxu0 %v1375
        %1406 = vmatprep.subr.mxu0 0.0
        %1407 = vmatpush1.msra.mxu0 %v1376
        %1408 = vmatprep.subr.mxu0 0.0
        %1409 = vmatpush1.msra.mxu0 %v1377
        %1410 = vmatprep.subr.mxu0 0.0
        %1411 = vmatpush1.msra.mxu0 0.0
        %1412 = vmatprep.subr.mxu0 0.0
        %1413 = vmatpush1.msra.mxu0 0.0
        %1414 = vmatprep.subr.mxu0 0.0
        %1415 = vmatpush1.msra.mxu0 0.0
        %1416 = vmatprep.subr.mxu0 0.0
        %1417 = vmatpush1.msra.mxu0 0.0
        %1418 = vmatprep.subr.mxu0 0.0
        %1419 = vmatpush1.msra.mxu0 0.0
        %1420 = vmatprep.subr.mxu0 0.0
        %1421 = vmatpush1.msra.mxu0 0.0
        %1422 = vmatprep.subr.mxu0 0.0
        %1423 = vmatpush1.msra.mxu0 0.0
        %1424 = vmatprep.subr.mxu0 0.0
        %1425 = vmatpush1.msra.mxu0 0.0
        %1426 = vmatprep.subr.mxu0 0.0
        %1427 = vmatpush1.msra.mxu0 0.0
        %1428 = vmatprep.subr.mxu0 0.0
        %1429 = vmatpush1.msra.mxu0 0.0
        %1430 = vmatprep.subr.mxu0 0.0
        %1431 = vmatpush1.msra.mxu0 0.0
        %1432 = vmatprep.subr.mxu0 0.0
        %1433 = vmatpush1.msra.mxu0 0.0
        %1434 = vmatprep.subr.mxu0 0.0
        %1435 = vmatpush1.msra.mxu0 0.0
        %1436 = vmatprep.subr.mxu0 0.0
        %1437 = vmatpush1.msra.mxu0 0.0
        %1438 = vmatprep.subr.mxu0 0.0
        %1439 = vmatpush1.msra.mxu0 0.0
        %1440 = vmatprep.subr.mxu0 0.0
        %1441 = vmatpush1.msra.mxu0 0.0
        %1442 = vmatprep.mubr.f32.mxu0 0.0
        %1443 = vmatmul.mubr.f32.gmra.mrb[0].mxu0 %v1330
        %v1444 = vpop.f32.mrb[0].mxu0
        %v1445 = vadd.f32 0.0, %v1444
        %v1446 = vpop.f32.mrb[0].mxu0
        %1447 = vmatprep.mubr.f32.mxu0 0.0
        %1448 = vmatmul.mubr.f32.gmra.mrb[0].mxu0 %v1331
        %v1449 = vpop.f32.mrb[0].mxu0
        %v1450 = vadd.f32 0.0, %v1449
        %v1451 = vpop.f32.mrb[0].mxu0
        %1452 = vmatprep.mubr.f32.mxu0 0.0
        %1453 = vmatmul.mubr.f32.gmra.mrb[0].mxu0 %v1332
        %v1454 = vpop.f32.mrb[0].mxu0
        %v1455 = vadd.f32 0.0, %v1454
        %v1456 = vpop.f32.mrb[0].mxu0
        %1457 = vmatprep.mubr.f32.mxu0 0.0
        %1458 = vmatmul.mubr.f32.gmra.mrb[0].mxu0 %v1333
        %v1459 = vpop.f32.mrb[0].mxu0
        %v1460 = vadd.f32 0.0, %v1459
        %v1461 = vpop.f32.mrb[0].mxu0
        %1462 = vmatprep.mubr.f32.mxu0 0.0
        %1463 = vmatmul.mubr.f32.gmra.mrb[0].mxu0 %v1334
        %v1464 = vpop.f32.mrb[0].mxu0
        %v1465 = vadd.f32 0.0, %v1464
        %v1466 = vpop.f32.mrb[0].mxu0
        %1467 = vmatprep.mubr.f32.mxu0 0.0
        %1468 = vmatmul.mubr.f32.gmra.mrb[0].mxu0 %v1335
        %v1469 = vpop.f32.mrb[0].mxu0
        %v1470 = vadd.f32 0.0, %v1469
        %v1471 = vpop.f32.mrb[0].mxu0
        %1472 = vmatprep.mubr.f32.mxu0 0.0
        %1473 = vmatmul.mubr.f32.gmra.mrb[0].mxu0 %v1336
        %v1474 = vpop.f32.mrb[0].mxu0
        %v1475 = vadd.f32 0.0, %v1474
        %v1476 = vpop.f32.mrb[0].mxu0
        %1477 = vmatprep.mubr.f32.mxu0 0.0
        %1478 = vmatmul.mubr.f32.gmra.mrb[0].mxu0 %v1337
        %v1479 = vpop.f32.mrb[0].mxu0
        %v1480 = vadd.f32 0.0, %v1479
        %v1481 = vpop.f32.mrb[0].mxu0
        %1482 = vmatprep.mubr.f32.mxu0 0.0
        %1483 = vmatmul.mubr.f32.gmra.mrb[0].mxu0 %v1338
        %v1484 = vpop.f32.mrb[0].mxu0
        %v1485 = vadd.f32 0.0, %v1484
        %v1486 = vpop.f32.mrb[0].mxu0
        %1487 = vmatprep.mubr.f32.mxu0 0.0
        %1488 = vmatmul.mubr.f32.gmra.mrb[0].mxu0 %v1339
        %v1489 = vpop.f32.mrb[0].mxu0
        %v1490 = vadd.f32 0.0, %v1489
        %v1491 = vpop.f32.mrb[0].mxu0
        %1492 = vmatprep.mubr.f32.mxu0 0.0
        %1493 = vmatmul.mubr.f32.gmra.mrb[0].mxu0 %v1340
        %v1494 = vpop.f32.mrb[0].mxu0
        %v1495 = vadd.f32 0.0, %v1494
        %v1496 = vpop.f32.mrb[0].mxu0
        %1497 = vmatprep.mubr.f32.mxu0 0.0
        %1498 = vmatmul.mubr.f32.gmra.mrb[0].mxu0 %v1341
        %v1499 = vpop.f32.mrb[0].mxu0
        %v1500 = vadd.f32 0.0, %v1499
        %v1501 = vpop.f32.mrb[0].mxu0
        %1502 = vmatprep.mubr.f32.mxu0 0.0
        %1503 = vmatmul.mubr.f32.gmra.mrb[0].mxu0 %v1342
        %v1504 = vpop.f32.mrb[0].mxu0
        %v1505 = vadd.f32 0.0, %v1504
        %v1506 = vpop.f32.mrb[0].mxu0
        %1507 = vmatprep.mubr.f32.mxu0 0.0
        %1508 = vmatmul.mubr.f32.gmra.mrb[0].mxu0 %v1343
        %v1509 = vpop.f32.mrb[0].mxu0
        %v1510 = vadd.f32 0.0, %v1509
        %v1511 = vpop.f32.mrb[0].mxu0
        %1512 = vmatprep.mubr.f32.mxu0 0.0
        %1513 = vmatmul.mubr.f32.gmra.mrb[0].mxu0 %v1344
        %v1514 = vpop.f32.mrb[0].mxu0
        %v1515 = vadd.f32 0.0, %v1514
        %v1516 = vpop.f32.mrb[0].mxu0
        %1517 = vmatprep.mubr.f32.mxu0 0.0
        %1518 = vmatmul.mubr.f32.gmra.mrb[0].mxu0 %v1345
        %v1519 = vpop.f32.mrb[0].mxu0
        %v1520 = vadd.f32 0.0, %v1519
        %v1521 = vpop.f32.mrb[0].mxu0
        %1522 = vdwg.mxu0
        %1523 = vmatprep.subr.mxu0 0.0
        %1524 = vmatpush1.msra.mxu0 %v1346
        %1525 = vmatprep.subr.mxu0 0.0
        %1526 = vmatpush1.msra.mxu0 %v1347
        %1527 = vmatprep.subr.mxu0 0.0
        %1528 = vmatpush1.msra.mxu0 %v1348
        %1529 = vmatprep.subr.mxu0 0.0
        %1530 = vmatpush1.msra.mxu0 %v1349
        %1531 = vmatprep.subr.mxu0 0.0
        %1532 = vmatpush1.msra.mxu0 %v1350
        %1533 = vmatprep.subr.mxu0 0.0
        %1534 = vmatpush1.msra.mxu0 %v1351
        %1535 = vmatprep.subr.mxu0 0.0
        %1536 = vmatpush1.msra.mxu0 %v1352
        %1537 = vmatprep.subr.mxu0 0.0
        %1538 = vmatpush1.msra.mxu0 %v1353
        %1539 = vmatprep.subr.mxu0 0.0
        %1540 = vmatpush1.msra.mxu0 %v1354
        %1541 = vmatprep.subr.mxu0 0.0
        %1542 = vmatpush1.msra.mxu0 %v1355
        %1543 = vmatprep.subr.mxu0 0.0
        %1544 = vmatpush1.msra.mxu0 %v1356
        %1545 = vmatprep.subr.mxu0 0.0
        %1546 = vmatpush1.msra.mxu0 %v1357
        %1547 = vmatprep.subr.mxu0 0.0
        %1548 = vmatpush1.msra.mxu0 %v1358
        %1549 = vmatprep.subr.mxu0 0.0
        %1550 = vmatpush1.msra.mxu0 %v1359
        %1551 = vmatprep.subr.mxu0 0.0
        %1552 = vmatpush1.msra.mxu0 %v1360
        %1553 = vmatprep.subr.mxu0 0.0
        %1554 = vmatpush1.msra.mxu0 %v1361
        %1555 = vmatprep.subr.mxu0 0.0
        %1556 = vmatpush1.msra.mxu0 0.0
        %1557 = vmatprep.subr.mxu0 0.0
        %1558 = vmatpush1.msra.mxu0 0.0
        %1559 = vmatprep.subr.mxu0 0.0
        %1560 = vmatpush1.msra.mxu0 0.0
        %1561 = vmatprep.subr.mxu0 0.0
        %1562 = vmatpush1.msra.mxu0 0.0
        %1563 = vmatprep.subr.mxu0 0.0
        %1564 = vmatpush1.msra.mxu0 0.0
        %1565 = vmatprep.subr.mxu0 0.0
        %1566 = vmatpush1.msra.mxu0 0.0
        %1567 = vmatprep.subr.mxu0 0.0
        %1568 = vmatpush1.msra.mxu0 0.0
        %1569 = vmatprep.subr.mxu0 0.0
        %1570 = vmatpush1.msra.mxu0 0.0
        %1571 = vmatprep.subr.mxu0 0.0
        %1572 = vmatpush1.msra.mxu0 0.0
        %1573 = vmatprep.subr.mxu0 0.0
        %1574 = vmatpush1.msra.mxu0 0.0
        %1575 = vmatprep.subr.mxu0 0.0
        %1576 = vmatpush1.msra.mxu0 0.0
        %1577 = vmatprep.subr.mxu0 0.0
        %1578 = vmatpush1.msra.mxu0 0.0
        %1579 = vmatprep.subr.mxu0 0.0
        %1580 = vmatpush1.msra.mxu0 0.0
        %1581 = vmatprep.subr.mxu0 0.0
        %1582 = vmatpush1.msra.mxu0 0.0
        %1583 = vmatprep.subr.mxu0 0.0
        %1584 = vmatpush1.msra.mxu0 0.0
        %1585 = vmatprep.subr.mxu0 0.0
        %1586 = vmatpush1.msra.mxu0 0.0
        %1587 = vmatprep.mubr.f32.mxu0 0.0
        %1588 = vmatmul.mubr.f32.gmra.mrb[0].mxu0 %v955
        %v1589 = vpop.f32.mrb[0].mxu0
        %v1590 = vadd.f32 %v1445, %v1589
        %v1591 = vpop.f32.mrb[0].mxu0
        %1592 = vmatprep.mubr.f32.mxu0 0.0
        %1593 = vmatmul.mubr.f32.gmra.mrb[0].mxu0 %v956
        %v1594 = vpop.f32.mrb[0].mxu0
        %v1595 = vadd.f32 %v1450, %v1594
        %v1596 = vpop.f32.mrb[0].mxu0
        %1597 = vmatprep.mubr.f32.mxu0 0.0
        %1598 = vmatmul.mubr.f32.gmra.mrb[0].mxu0 %v957
        %v1599 = vpop.f32.mrb[0].mxu0
        %v1600 = vadd.f32 %v1455, %v1599
        %v1601 = vpop.f32.mrb[0].mxu0
        %1602 = vmatprep.mubr.f32.mxu0 0.0
        %1603 = vmatmul.mubr.f32.gmra.mrb[0].mxu0 %v958
        %v1604 = vpop.f32.mrb[0].mxu0
        %v1605 = vadd.f32 %v1460, %v1604
        %v1606 = vpop.f32.mrb[0].mxu0
        %1607 = vmatprep.mubr.f32.mxu0 0.0
        %1608 = vmatmul.mubr.f32.gmra.mrb[0].mxu0 %v959
        %v1609 = vpop.f32.mrb[0].mxu0
        %v1610 = vadd.f32 %v1465, %v1609
        %v1611 = vpop.f32.mrb[0].mxu0
        %1612 = vmatprep.mubr.f32.mxu0 0.0
        %1613 = vmatmul.mubr.f32.gmra.mrb[0].mxu0 %v960
        %v1614 = vpop.f32.mrb[0].mxu0
        %v1615 = vadd.f32 %v1470, %v1614
        %v1616 = vpop.f32.mrb[0].mxu0
        %1617 = vmatprep.mubr.f32.mxu0 0.0
        %1618 = vmatmul.mubr.f32.gmra.mrb[0].mxu0 %v961
        %v1619 = vpop.f32.mrb[0].mxu0
        %v1620 = vadd.f32 %v1475, %v1619
        %v1621 = vpop.f32.mrb[0].mxu0
        %1622 = vmatprep.mubr.f32.mxu0 0.0
        %1623 = vmatmul.mubr.f32.gmra.mrb[0].mxu0 %v962
        %v1624 = vpop.f32.mrb[0].mxu0
        %v1625 = vadd.f32 %v1480, %v1624
        %v1626 = vpop.f32.mrb[0].mxu0
        %1627 = vmatprep.mubr.f32.mxu0 0.0
        %1628 = vmatmul.mubr.f32.gmra.mrb[0].mxu0 %v963
        %v1629 = vpop.f32.mrb[0].mxu0
        %v1630 = vadd.f32 %v1485, %v1629
        %v1631 = vpop.f32.mrb[0].mxu0
        %1632 = vmatprep.mubr.f32.mxu0 0.0
        %1633 = vmatmul.mubr.f32.gmra.mrb[0].mxu0 %v964
        %v1634 = vpop.f32.mrb[0].mxu0
        %v1635 = vadd.f32 %v1490, %v1634
        %v1636 = vpop.f32.mrb[0].mxu0
        %1637 = vmatprep.mubr.f32.mxu0 0.0
        %1638 = vmatmul.mubr.f32.gmra.mrb[0].mxu0 %v965
        %v1639 = vpop.f32.mrb[0].mxu0
        %v1640 = vadd.f32 %v1495, %v1639
        %v1641 = vpop.f32.mrb[0].mxu0
        %1642 = vmatprep.mubr.f32.mxu0 0.0
        %1643 = vmatmul.mubr.f32.gmra.mrb[0].mxu0 %v966
        %v1644 = vpop.f32.mrb[0].mxu0
        %v1645 = vadd.f32 %v1500, %v1644
        %v1646 = vpop.f32.mrb[0].mxu0
        %1647 = vmatprep.mubr.f32.mxu0 0.0
        %1648 = vmatmul.mubr.f32.gmra.mrb[0].mxu0 %v967
        %v1649 = vpop.f32.mrb[0].mxu0
        %v1650 = vadd.f32 %v1505, %v1649
        %v1651 = vpop.f32.mrb[0].mxu0
        %1652 = vmatprep.mubr.f32.mxu0 0.0
        %1653 = vmatmul.mubr.f32.gmra.mrb[0].mxu0 %v968
        %v1654 = vpop.f32.mrb[0].mxu0
        %v1655 = vadd.f32 %v1510, %v1654
        %v1656 = vpop.f32.mrb[0].mxu0
        %1657 = vmatprep.mubr.f32.mxu0 0.0
        %1658 = vmatmul.mubr.f32.gmra.mrb[0].mxu0 %v969
        %v1659 = vpop.f32.mrb[0].mxu0
        %v1660 = vadd.f32 %v1515, %v1659
        %v1661 = vpop.f32.mrb[0].mxu0
        %1662 = vmatprep.mubr.f32.mxu0 0.0
        %1663 = vmatmul.mubr.f32.gmra.mrb[0].mxu0 %v970
        %v1664 = vpop.f32.mrb[0].mxu0
        %v1665 = vadd.f32 %v1520, %v1664
        %v1666 = vpop.f32.mrb[0].mxu0
        %1667 = vdwg.mxu0
        %v1668 = vld [vmem:[#allocation5 + $0x505] sm:$0x1]
        %v1669 = vlaneseq
        %v1670 = vshrl.u32 %v1669, 7
        %v1671 = vsub.s32 0, %v1670
        %v1672 = vrot.slane %v1668, %v1671
        %v1673 = vadd.f32 %v1590, %v1672
        %v1674 = vadd.f32 %v1595, %v1672
        %v1675 = vadd.f32 %v1600, %v1672
        %v1676 = vadd.f32 %v1605, %v1672
        %v1677 = vadd.f32 %v1610, %v1672
        %v1678 = vadd.f32 %v1615, %v1672
        %v1679 = vadd.f32 %v1620, %v1672
        %v1680 = vadd.f32 %v1625, %v1672
        %v1681 = vadd.f32 %v1630, %v1672
        %v1682 = vadd.f32 %v1635, %v1672
        %v1683 = vadd.f32 %v1640, %v1672
        %v1684 = vadd.f32 %v1645, %v1672
        %v1685 = vadd.f32 %v1650, %v1672
        %v1686 = vadd.f32 %v1655, %v1672
        %v1687 = vadd.f32 %v1660, %v1672
        %v1688 = vadd.f32 %v1665, %v1672
        %v1689 = vmax.f32 %v1673, 0.0
        %v1690 = vmax.f32 %v1674, 0.0
        %v1691 = vmax.f32 %v1675, 0.0
        %v1692 = vmax.f32 %v1676, 0.0
        %v1693 = vmax.f32 %v1677, 0.0
        %v1694 = vmax.f32 %v1678, 0.0
        %v1695 = vmax.f32 %v1679, 0.0
        %v1696 = vmax.f32 %v1680, 0.0
        %v1697 = vmax.f32 %v1681, 0.0
        %v1698 = vmax.f32 %v1682, 0.0
        %v1699 = vmax.f32 %v1683, 0.0
        %v1700 = vmax.f32 %v1684, 0.0
        %v1701 = vmax.f32 %v1685, 0.0
        %v1702 = vmax.f32 %v1686, 0.0
        %v1703 = vmax.f32 %v1687, 0.0
        %v1704 = vmax.f32 %v1688, 0.0
        %v1705 = vld [vmem:[#allocation5 + $0x400] sm:$0xff]
        %v1706 = vld [vmem:[#allocation5 + $0x408] sm:$0xff]
        %v1707 = vld [vmem:[#allocation5 + $0x410] sm:$0xff]
        %v1708 = vld [vmem:[#allocation5 + $0x418] sm:$0xff]
        %v1709 = vld [vmem:[#allocation5 + $0x420] sm:$0xff]
        %v1710 = vld [vmem:[#allocation5 + $0x428] sm:$0xff]
        %v1711 = vld [vmem:[#allocation5 + $0x430] sm:$0xff]
        %v1712 = vld [vmem:[#allocation5 + $0x438] sm:$0xff]
        %v1713 = vld [vmem:[#allocation5 + $0x440] sm:$0xff]
        %v1714 = vld [vmem:[#allocation5 + $0x448] sm:$0xff]
        %v1715 = vld [vmem:[#allocation5 + $0x450] sm:$0xff]
        %v1716 = vld [vmem:[#allocation5 + $0x458] sm:$0xff]
        %v1717 = vld [vmem:[#allocation5 + $0x460] sm:$0xff]
        %v1718 = vld [vmem:[#allocation5 + $0x468] sm:$0xff]
        %v1719 = vld [vmem:[#allocation5 + $0x470] sm:$0xff]
        %v1720 = vld [vmem:[#allocation5 + $0x478] sm:$0xff]
        %v1721 = vld [vmem:[#allocation5 + $0x506] sm:$0x1]
        %v1722 = vlaneseq
        %v1723 = vshrl.u32 %v1722, 7
        %v1724 = vsub.s32 0, %v1723
        %v1725 = vrot.slane %v1721, %v1724
        %1726 = vmatprep.subr.mxu0 0.0
        %1727 = vmatpush1.msra.mxu0 %v1705
        %1728 = vmatprep.subr.mxu0 0.0
        %1729 = vmatpush1.msra.mxu0 %v1706
        %1730 = vmatprep.subr.mxu0 0.0
        %1731 = vmatpush1.msra.mxu0 %v1707
        %1732 = vmatprep.subr.mxu0 0.0
        %1733 = vmatpush1.msra.mxu0 %v1708
        %1734 = vmatprep.subr.mxu0 0.0
        %1735 = vmatpush1.msra.mxu0 %v1709
        %1736 = vmatprep.subr.mxu0 0.0
        %1737 = vmatpush1.msra.mxu0 %v1710
        %1738 = vmatprep.subr.mxu0 0.0
        %1739 = vmatpush1.msra.mxu0 %v1711
        %1740 = vmatprep.subr.mxu0 0.0
        %1741 = vmatpush1.msra.mxu0 %v1712
        %1742 = vmatprep.subr.mxu0 0.0
        %1743 = vmatpush1.msra.mxu0 %v1713
        %1744 = vmatprep.subr.mxu0 0.0
        %1745 = vmatpush1.msra.mxu0 %v1714
        %1746 = vmatprep.subr.mxu0 0.0
        %1747 = vmatpush1.msra.mxu0 %v1715
        %1748 = vmatprep.subr.mxu0 0.0
        %1749 = vmatpush1.msra.mxu0 %v1716
        %1750 = vmatprep.subr.mxu0 0.0
        %1751 = vmatpush1.msra.mxu0 %v1717
        %1752 = vmatprep.subr.mxu0 0.0
        %1753 = vmatpush1.msra.mxu0 %v1718
        %1754 = vmatprep.subr.mxu0 0.0
        %1755 = vmatpush1.msra.mxu0 %v1719
        %1756 = vmatprep.subr.mxu0 0.0
        %1757 = vmatpush1.msra.mxu0 %v1720
        %1758 = vmatprep.subr.mxu0 0.0
        %1759 = vmatpush1.msra.mxu0 0.0
        %1760 = vmatprep.subr.mxu0 0.0
        %1761 = vmatpush1.msra.mxu0 0.0
        %1762 = vmatprep.subr.mxu0 0.0
        %1763 = vmatpush1.msra.mxu0 0.0
        %1764 = vmatprep.subr.mxu0 0.0
        %1765 = vmatpush1.msra.mxu0 0.0
        %1766 = vmatprep.subr.mxu0 0.0
        %1767 = vmatpush1.msra.mxu0 0.0
        %1768 = vmatprep.subr.mxu0 0.0
        %1769 = vmatpush1.msra.mxu0 0.0
        %1770 = vmatprep.subr.mxu0 0.0
        %1771 = vmatpush1.msra.mxu0 0.0
        %1772 = vmatprep.subr.mxu0 0.0
        %1773 = vmatpush1.msra.mxu0 0.0
        %1774 = vmatprep.subr.mxu0 0.0
        %1775 = vmatpush1.msra.mxu0 0.0
        %1776 = vmatprep.subr.mxu0 0.0
        %1777 = vmatpush1.msra.mxu0 0.0
        %1778 = vmatprep.subr.mxu0 0.0
        %1779 = vmatpush1.msra.mxu0 0.0
        %1780 = vmatprep.subr.mxu0 0.0
        %1781 = vmatpush1.msra.mxu0 0.0
        %1782 = vmatprep.subr.mxu0 0.0
        %1783 = vmatpush1.msra.mxu0 0.0
        %1784 = vmatprep.subr.mxu0 0.0
        %1785 = vmatpush1.msra.mxu0 0.0
        %1786 = vmatprep.subr.mxu0 0.0
        %1787 = vmatpush1.msra.mxu0 0.0
        %1788 = vmatprep.subr.mxu0 0.0
        %1789 = vmatpush1.msra.mxu0 0.0
        %1790 = vmatprep.mubr.f32.mxu0 0.0
        %1791 = vmatmul.mubr.f32.gmra.mrb[0].mxu0 %v1689
        %v1792 = vpop.f32.mrb[0].mxu0
        %v1793 = vadd.f32 %v1725, %v1792
        %v1794 = vpop.f32.mrb[0].mxu0
        %1795 = vmatprep.mubr.f32.mxu0 0.0
        %1796 = vmatmul.mubr.f32.gmra.mrb[0].mxu0 %v1690
        %v1797 = vpop.f32.mrb[0].mxu0
        %v1798 = vadd.f32 %v1725, %v1797
        %v1799 = vpop.f32.mrb[0].mxu0
        %1800 = vmatprep.mubr.f32.mxu0 0.0
        %1801 = vmatmul.mubr.f32.gmra.mrb[0].mxu0 %v1691
        %v1802 = vpop.f32.mrb[0].mxu0
        %v1803 = vadd.f32 %v1725, %v1802
        %v1804 = vpop.f32.mrb[0].mxu0
        %1805 = vmatprep.mubr.f32.mxu0 0.0
        %1806 = vmatmul.mubr.f32.gmra.mrb[0].mxu0 %v1692
        %v1807 = vpop.f32.mrb[0].mxu0
        %v1808 = vadd.f32 %v1725, %v1807
        %v1809 = vpop.f32.mrb[0].mxu0
        %1810 = vmatprep.mubr.f32.mxu0 0.0
        %1811 = vmatmul.mubr.f32.gmra.mrb[0].mxu0 %v1693
        %v1812 = vpop.f32.mrb[0].mxu0
        %v1813 = vadd.f32 %v1725, %v1812
        %v1814 = vpop.f32.mrb[0].mxu0
        %1815 = vmatprep.mubr.f32.mxu0 0.0
        %1816 = vmatmul.mubr.f32.gmra.mrb[0].mxu0 %v1694
        %v1817 = vpop.f32.mrb[0].mxu0
        %v1818 = vadd.f32 %v1725, %v1817
        %v1819 = vpop.f32.mrb[0].mxu0
        %1820 = vmatprep.mubr.f32.mxu0 0.0
        %1821 = vmatmul.mubr.f32.gmra.mrb[0].mxu0 %v1695
        %v1822 = vpop.f32.mrb[0].mxu0
        %v1823 = vadd.f32 %v1725, %v1822
        %v1824 = vpop.f32.mrb[0].mxu0
        %1825 = vmatprep.mubr.f32.mxu0 0.0
        %1826 = vmatmul.mubr.f32.gmra.mrb[0].mxu0 %v1696
        %v1827 = vpop.f32.mrb[0].mxu0
        %v1828 = vadd.f32 %v1725, %v1827
        %v1829 = vpop.f32.mrb[0].mxu0
        %1830 = vmatprep.mubr.f32.mxu0 0.0
        %1831 = vmatmul.mubr.f32.gmra.mrb[0].mxu0 %v1697
        %v1832 = vpop.f32.mrb[0].mxu0
        %v1833 = vadd.f32 %v1725, %v1832
        %v1834 = vpop.f32.mrb[0].mxu0
        %1835 = vmatprep.mubr.f32.mxu0 0.0
        %1836 = vmatmul.mubr.f32.gmra.mrb[0].mxu0 %v1698
        %v1837 = vpop.f32.mrb[0].mxu0
        %v1838 = vadd.f32 %v1725, %v1837
        %v1839 = vpop.f32.mrb[0].mxu0
        %1840 = vmatprep.mubr.f32.mxu0 0.0
        %1841 = vmatmul.mubr.f32.gmra.mrb[0].mxu0 %v1699
        %v1842 = vpop.f32.mrb[0].mxu0
        %v1843 = vadd.f32 %v1725, %v1842
        %v1844 = vpop.f32.mrb[0].mxu0
        %1845 = vmatprep.mubr.f32.mxu0 0.0
        %1846 = vmatmul.mubr.f32.gmra.mrb[0].mxu0 %v1700
        %v1847 = vpop.f32.mrb[0].mxu0
        %v1848 = vadd.f32 %v1725, %v1847
        %v1849 = vpop.f32.mrb[0].mxu0
        %1850 = vmatprep.mubr.f32.mxu0 0.0
        %1851 = vmatmul.mubr.f32.gmra.mrb[0].mxu0 %v1701
        %v1852 = vpop.f32.mrb[0].mxu0
        %v1853 = vadd.f32 %v1725, %v1852
        %v1854 = vpop.f32.mrb[0].mxu0
        %1855 = vmatprep.mubr.f32.mxu0 0.0
        %1856 = vmatmul.mubr.f32.gmra.mrb[0].mxu0 %v1702
        %v1857 = vpop.f32.mrb[0].mxu0
        %v1858 = vadd.f32 %v1725, %v1857
        %v1859 = vpop.f32.mrb[0].mxu0
        %1860 = vmatprep.mubr.f32.mxu0 0.0
        %1861 = vmatmul.mubr.f32.gmra.mrb[0].mxu0 %v1703
        %v1862 = vpop.f32.mrb[0].mxu0
        %v1863 = vadd.f32 %v1725, %v1862
        %v1864 = vpop.f32.mrb[0].mxu0
        %1865 = vmatprep.mubr.f32.mxu0 0.0
        %1866 = vmatmul.mubr.f32.gmra.mrb[0].mxu0 %v1704
        %v1867 = vpop.f32.mrb[0].mxu0
        %v1868 = vadd.f32 %v1725, %v1867
        %v1869 = vpop.f32.mrb[0].mxu0
        %1870 = vdwg.mxu0
        %v1871 = vmax.f32 %v1793, 0.0
        %v1872 = vmax.f32 %v1798, 0.0
        %v1873 = vmax.f32 %v1803, 0.0
        %v1874 = vmax.f32 %v1808, 0.0
        %v1875 = vmax.f32 %v1813, 0.0
        %v1876 = vmax.f32 %v1818, 0.0
        %v1877 = vmax.f32 %v1823, 0.0
        %v1878 = vmax.f32 %v1828, 0.0
        %v1879 = vmax.f32 %v1833, 0.0
        %v1880 = vmax.f32 %v1838, 0.0
        %v1881 = vmax.f32 %v1843, 0.0
        %v1882 = vmax.f32 %v1848, 0.0
        %v1883 = vmax.f32 %v1853, 0.0
        %v1884 = vmax.f32 %v1858, 0.0
        %v1885 = vmax.f32 %v1863, 0.0
        %v1886 = vmax.f32 %v1868, 0.0
        %v1887 = vld [vmem:[#allocation5 + $0x480] sm:$0xff]
        %v1888 = vld [vmem:[#allocation5 + $0x488] sm:$0xff]
        %v1889 = vld [vmem:[#allocation5 + $0x490] sm:$0xff]
        %v1890 = vld [vmem:[#allocation5 + $0x498] sm:$0xff]
        %v1891 = vld [vmem:[#allocation5 + $0x4a0] sm:$0xff]
        %v1892 = vld [vmem:[#allocation5 + $0x4a8] sm:$0xff]
        %v1893 = vld [vmem:[#allocation5 + $0x4b0] sm:$0xff]
        %v1894 = vld [vmem:[#allocation5 + $0x4b8] sm:$0xff]
        %v1895 = vld [vmem:[#allocation5 + $0x4c0] sm:$0xff]
        %v1896 = vld [vmem:[#allocation5 + $0x4c8] sm:$0xff]
        %v1897 = vld [vmem:[#allocation5 + $0x4d0] sm:$0xff]
        %v1898 = vld [vmem:[#allocation5 + $0x4d8] sm:$0xff]
        %v1899 = vld [vmem:[#allocation5 + $0x4e0] sm:$0xff]
        %v1900 = vld [vmem:[#allocation5 + $0x4e8] sm:$0xff]
        %v1901 = vld [vmem:[#allocation5 + $0x4f0] sm:$0xff]
        %v1902 = vld [vmem:[#allocation5 + $0x4f8] sm:$0xff]
        %v1903 = vld [vmem:[#allocation5 + $0x507] sm:$0x1]
        %v1904 = vlaneseq
        %v1905 = vshrl.u32 %v1904, 7
        %v1906 = vsub.s32 0, %v1905
        %v1907 = vrot.slane %v1903, %v1906
        %1908 = vmatprep.subr.mxu0 0.0
        %1909 = vmatpush1.msra.mxu0 %v1887
        %1910 = vmatprep.subr.mxu0 0.0
        %1911 = vmatpush1.msra.mxu0 %v1888
        %1912 = vmatprep.subr.mxu0 0.0
        %1913 = vmatpush1.msra.mxu0 %v1889
        %1914 = vmatprep.subr.mxu0 0.0
        %1915 = vmatpush1.msra.mxu0 %v1890
        %1916 = vmatprep.subr.mxu0 0.0
        %1917 = vmatpush1.msra.mxu0 %v1891
        %1918 = vmatprep.subr.mxu0 0.0
        %1919 = vmatpush1.msra.mxu0 %v1892
        %1920 = vmatprep.subr.mxu0 0.0
        %1921 = vmatpush1.msra.mxu0 %v1893
        %1922 = vmatprep.subr.mxu0 0.0
        %1923 = vmatpush1.msra.mxu0 %v1894
        %1924 = vmatprep.subr.mxu0 0.0
        %1925 = vmatpush1.msra.mxu0 %v1895
        %1926 = vmatprep.subr.mxu0 0.0
        %1927 = vmatpush1.msra.mxu0 %v1896
        %1928 = vmatprep.subr.mxu0 0.0
        %1929 = vmatpush1.msra.mxu0 %v1897
        %1930 = vmatprep.subr.mxu0 0.0
        %1931 = vmatpush1.msra.mxu0 %v1898
        %1932 = vmatprep.subr.mxu0 0.0
        %1933 = vmatpush1.msra.mxu0 %v1899
        %1934 = vmatprep.subr.mxu0 0.0
        %1935 = vmatpush1.msra.mxu0 %v1900
        %1936 = vmatprep.subr.mxu0 0.0
        %1937 = vmatpush1.msra.mxu0 %v1901
        %1938 = vmatprep.subr.mxu0 0.0
        %1939 = vmatpush1.msra.mxu0 %v1902
        %1940 = vmatprep.subr.mxu0 0.0
        %1941 = vmatpush1.msra.mxu0 0.0
        %1942 = vmatprep.subr.mxu0 0.0
        %1943 = vmatpush1.msra.mxu0 0.0
        %1944 = vmatprep.subr.mxu0 0.0
        %1945 = vmatpush1.msra.mxu0 0.0
        %1946 = vmatprep.subr.mxu0 0.0
        %1947 = vmatpush1.msra.mxu0 0.0
        %1948 = vmatprep.subr.mxu0 0.0
        %1949 = vmatpush1.msra.mxu0 0.0
        %1950 = vmatprep.subr.mxu0 0.0
        %1951 = vmatpush1.msra.mxu0 0.0
        %1952 = vmatprep.subr.mxu0 0.0
        %1953 = vmatpush1.msra.mxu0 0.0
        %1954 = vmatprep.subr.mxu0 0.0
        %1955 = vmatpush1.msra.mxu0 0.0
        %1956 = vmatprep.subr.mxu0 0.0
        %1957 = vmatpush1.msra.mxu0 0.0
        %1958 = vmatprep.subr.mxu0 0.0
        %1959 = vmatpush1.msra.mxu0 0.0
        %1960 = vmatprep.subr.mxu0 0.0
        %1961 = vmatpush1.msra.mxu0 0.0
        %1962 = vmatprep.subr.mxu0 0.0
        %1963 = vmatpush1.msra.mxu0 0.0
        %1964 = vmatprep.subr.mxu0 0.0
        %1965 = vmatpush1.msra.mxu0 0.0
        %1966 = vmatprep.subr.mxu0 0.0
        %1967 = vmatpush1.msra.mxu0 0.0
        %1968 = vmatprep.subr.mxu0 0.0
        %1969 = vmatpush1.msra.mxu0 0.0
        %1970 = vmatprep.subr.mxu0 0.0
        %1971 = vmatpush1.msra.mxu0 0.0
        %1972 = vmatprep.mubr.f32.mxu0 0.0
        %1973 = vmatmul.mubr.f32.gmra.mrb[0].mxu0 %v1871
        %v1974 = vpop.f32.mrb[0].mxu0
        %v1975 = vadd.f32 %v1907, %v1974
        %v1976 = vpop.f32.mrb[0].mxu0
        %1977 = vmatprep.mubr.f32.mxu0 0.0
        %1978 = vmatmul.mubr.f32.gmra.mrb[0].mxu0 %v1872
        %v1979 = vpop.f32.mrb[0].mxu0
        %v1980 = vadd.f32 %v1907, %v1979
        %v1981 = vpop.f32.mrb[0].mxu0
        %1982 = vmatprep.mubr.f32.mxu0 0.0
        %1983 = vmatmul.mubr.f32.gmra.mrb[0].mxu0 %v1873
        %v1984 = vpop.f32.mrb[0].mxu0
        %v1985 = vadd.f32 %v1907, %v1984
        %v1986 = vpop.f32.mrb[0].mxu0
        %1987 = vmatprep.mubr.f32.mxu0 0.0
        %1988 = vmatmul.mubr.f32.gmra.mrb[0].mxu0 %v1874
        %v1989 = vpop.f32.mrb[0].mxu0
        %v1990 = vadd.f32 %v1907, %v1989
        %v1991 = vpop.f32.mrb[0].mxu0
        %1992 = vmatprep.mubr.f32.mxu0 0.0
        %1993 = vmatmul.mubr.f32.gmra.mrb[0].mxu0 %v1875
        %v1994 = vpop.f32.mrb[0].mxu0
        %v1995 = vadd.f32 %v1907, %v1994
        %v1996 = vpop.f32.mrb[0].mxu0
        %1997 = vmatprep.mubr.f32.mxu0 0.0
        %1998 = vmatmul.mubr.f32.gmra.mrb[0].mxu0 %v1876
        %v1999 = vpop.f32.mrb[0].mxu0
        %v2000 = vadd.f32 %v1907, %v1999
        %v2001 = vpop.f32.mrb[0].mxu0
        %2002 = vmatprep.mubr.f32.mxu0 0.0
        %2003 = vmatmul.mubr.f32.gmra.mrb[0].mxu0 %v1877
        %v2004 = vpop.f32.mrb[0].mxu0
        %v2005 = vadd.f32 %v1907, %v2004
        %v2006 = vpop.f32.mrb[0].mxu0
        %2007 = vmatprep.mubr.f32.mxu0 0.0
        %2008 = vmatmul.mubr.f32.gmra.mrb[0].mxu0 %v1878
        %v2009 = vpop.f32.mrb[0].mxu0
        %v2010 = vadd.f32 %v1907, %v2009
        %v2011 = vpop.f32.mrb[0].mxu0
        %2012 = vmatprep.mubr.f32.mxu0 0.0
        %2013 = vmatmul.mubr.f32.gmra.mrb[0].mxu0 %v1879
        %v2014 = vpop.f32.mrb[0].mxu0
        %v2015 = vadd.f32 %v1907, %v2014
        %v2016 = vpop.f32.mrb[0].mxu0
        %2017 = vmatprep.mubr.f32.mxu0 0.0
        %2018 = vmatmul.mubr.f32.gmra.mrb[0].mxu0 %v1880
        %v2019 = vpop.f32.mrb[0].mxu0
        %v2020 = vadd.f32 %v1907, %v2019
        %v2021 = vpop.f32.mrb[0].mxu0
        %2022 = vmatprep.mubr.f32.mxu0 0.0
        %2023 = vmatmul.mubr.f32.gmra.mrb[0].mxu0 %v1881
        %v2024 = vpop.f32.mrb[0].mxu0
        %v2025 = vadd.f32 %v1907, %v2024
        %v2026 = vpop.f32.mrb[0].mxu0
        %2027 = vmatprep.mubr.f32.mxu0 0.0
        %2028 = vmatmul.mubr.f32.gmra.mrb[0].mxu0 %v1882
        %v2029 = vpop.f32.mrb[0].mxu0
        %v2030 = vadd.f32 %v1907, %v2029
        %v2031 = vpop.f32.mrb[0].mxu0
        %2032 = vmatprep.mubr.f32.mxu0 0.0
        %2033 = vmatmul.mubr.f32.gmra.mrb[0].mxu0 %v1883
        %v2034 = vpop.f32.mrb[0].mxu0
        %v2035 = vadd.f32 %v1907, %v2034
        %v2036 = vpop.f32.mrb[0].mxu0
        %2037 = vmatprep.mubr.f32.mxu0 0.0
        %2038 = vmatmul.mubr.f32.gmra.mrb[0].mxu0 %v1884
        %v2039 = vpop.f32.mrb[0].mxu0
        %v2040 = vadd.f32 %v1907, %v2039
        %v2041 = vpop.f32.mrb[0].mxu0
        %2042 = vmatprep.mubr.f32.mxu0 0.0
        %2043 = vmatmul.mubr.f32.gmra.mrb[0].mxu0 %v1885
        %v2044 = vpop.f32.mrb[0].mxu0
        %v2045 = vadd.f32 %v1907, %v2044
        %v2046 = vpop.f32.mrb[0].mxu0
        %2047 = vmatprep.mubr.f32.mxu0 0.0
        %2048 = vmatmul.mubr.f32.gmra.mrb[0].mxu0 %v1886
        %v2049 = vpop.f32.mrb[0].mxu0
        %v2050 = vadd.f32 %v1907, %v2049
        %v2051 = vpop.f32.mrb[0].mxu0
        %2052 = vdwg.mxu0
        %2053 = vst [vmem:[%s176] sm:$0xff] %v1975
        %2054 = vst [vmem:[%s176 + $0x8] sm:$0xff] %v1980
        %2055 = vst [vmem:[%s176 + $0x10] sm:$0xff] %v1985
        %2056 = vst [vmem:[%s176 + $0x18] sm:$0xff] %v1990
        %2057 = vst [vmem:[%s176 + $0x20] sm:$0xff] %v1995
        %2058 = vst [vmem:[%s176 + $0x28] sm:$0xff] %v2000
        %2059 = vst [vmem:[%s176 + $0x30] sm:$0xff] %v2005
        %2060 = vst [vmem:[%s176 + $0x38] sm:$0xff] %v2010
        %2061 = vst [vmem:[%s176 + $0x40] sm:$0xff] %v2015
        %2062 = vst [vmem:[%s176 + $0x48] sm:$0xff] %v2020
        %2063 = vst [vmem:[%s176 + $0x50] sm:$0xff] %v2025
        %2064 = vst [vmem:[%s176 + $0x58] sm:$0xff] %v2030
        %2065 = vst [vmem:[%s176 + $0x60] sm:$0xff] %v2035
        %2066 = vst [vmem:[%s176 + $0x68] sm:$0xff] %v2040
        %2067 = vst [vmem:[%s176 + $0x70] sm:$0xff] %v2045
        %2068 = vst [vmem:[%s176 + $0x78] sm:$0xff] %v2050
        %s2069 = sand.u32 %s75, 1
        %s2070 = scalar_lea.sflag [#allocation4], %s2069
        %s2071 = sand.u32 %s75, 1
        %s2072 = smul.addr %s2071, 128
        %s2073 = scalar_lea.vmem [#allocation7], %s2072
        // Predicated region
        $region37: #{tpu_custom_call.1} parent=27 // pred_check
          %p2074 = pneg %p85
        $region38: #{tpu_custom_call.1} parent=27 // pred_check_branch
          %2076 = sbr.rel (%p2074) target = $region40
        $region39: #{tpu_custom_call.1} parent=27 // pred_region
          %s2077 = smul.u32 16, %s20
          %s2079 = ssub.s32 2048, 2048
          %2080 = vsyncadd %s2070, %s2079
          %s2081 = smul.addr %s2077, 128
          %s2082 = scalar_lea.hbm %s2, %s2081
          %s2083 = sshll.u32 %s2073, 4
          %s2084 = int_to_ptr.vmem [resolvable:$true] %s2083
          %2089 = dma.vmem_to_hbm [thread:$0]  %s2084, 2048, %s2082, %s2070, 128, 128, 8
        $region40: #{tpu_custom_call.1} parent=27 // pred_fallthru
          _
      $region28: #{tpu_custom_call.1} parent=5 // pred_fallthru
        _
      %p2090 = scmp.le.s32.totalorder 2, %s15
      // Predicated region
      $region41: #{tpu_custom_call.1} parent=5 // pred_check
        %p2091 = pneg %p2090
      $region42: #{tpu_custom_call.1} parent=5 // pred_check_branch
        %2093 = sbr.rel (%p2091) target = $region44
      $region43: #{tpu_custom_call.1} parent=5 // pred_region
        %s2094 = ssub.s32 %s15, 2
        // Predicated region
        $region45: #{tpu_custom_call.1} parent=43 // pred_check
          %p2095 = pneg %p91
        $region46: #{tpu_custom_call.1} parent=43 // pred_check_branch
          %2097 = sbr.rel (%p2095) target = $region48
        $region47: #{tpu_custom_call.1} parent=43 // pred_region
          %s2098 = sand.u32 %s76, 1
          %s2099 = scalar_lea.sflag [#allocation4], %s2098
          %s2100 = sand.u32 %s76, 1
          %s2101 = smul.addr %s2100, 128
          %s2102 = scalar_lea.vmem [#allocation7], %s2101
          %2103 = dma.done %s2099, 2048
        $region48: #{tpu_custom_call.1} parent=43 // pred_fallthru
          _
      $region44: #{tpu_custom_call.1} parent=5 // pred_fallthru
        _
    $region6: #{tpu_custom_call.1} parent=1 // loop_footer
      %s19 = sadd.s32 1, %s15
    $region7: #{tpu_custom_call.1} parent=1 // loop_footer_branch
      %14 = sbr.rel target = $region3
    $region8: #{tpu_custom_call.1} parent=1 // loop_exit
      _
    %2104 = vsyncpa [#allocation3], 1
    %s2105 = scalar_lea.sflag [#allocation3], 1
    %2106 = vsyncpa %s2105, 1
    %2107 = vsyncpa [#allocation6], 1
    %2108 = vsyncpa [#allocation4], 1
    %s2109 = scalar_lea.sflag [#allocation4], 1
    %2110 = vsyncpa %s2109, 1

</llo_original>
